<compile_context>
chip_gen: v6e
topology: v6e:2x2x1
jax: 0.10.0
libtpu: 0.0.40
codegen_flags: <defaults>
</compile_context>

<pallas_src>
import jax
import jax.numpy as jnp
from jax.experimental import pallas as pl
from jax.experimental.pallas import tpu as pltpu


_TARGET_F_TILE_BYTES = 4 * 1024 * 1024   # per-grid-step F DMA target (~2-8 MiB)
_MAX_TN = 8192


def _round_up(x, m):
    return ((x + m - 1) // m) * m


def _cdiv(a, b):
    return (a + b - 1) // b


def _vmem_budget_bytes():
    """~75% of per-core VMEM: 48 MiB on v7x, 96 MiB on v5e/v6e (fallback 48 MiB)."""
    cap = None
    try:
        cap = int(pltpu.get_tpu_info().vmem_capacity_bytes)
    except Exception:
        cap = None
    if not cap or cap <= 0:
        cap = 64 * 1024 * 1024
    return (cap * 3) // 4


def ghat_forward_kernel(scale_ref, f_ref, w_ref, b_ref, o_ref):
    """One (row-tile, k-tile) step of O = scale * (F @ W + b).

    The (tn, d) f32 output tile doubles as the K-axis accumulator (its block
    index is constant along k, so it stays VMEM-resident across the reduction).
    """
    k = pl.program_id(1)

    part = jnp.dot(f_ref[...], w_ref[...], preferred_element_type=jnp.float32)

    @pl.when(k == 0)
    def _():
        o_ref[...] = part

    @pl.when(k > 0)
    def _():
        o_ref[...] += part

    @pl.when(k == pl.num_programs(1) - 1)
    def _():
        o_ref[...] = scale_ref[0] * (o_ref[...] + b_ref[...])


def ghat_gradient_layer_mse_forward(F, W, b, linesearch, *,
                                    compute_dtype=jnp.bfloat16,
                                    target_tile_bytes=_TARGET_F_TILE_BYTES):
    """linesearch * (F @ W + b) via a Pallas TPU kernel.

    F: (N, p), W: (p, d), b: (d,), linesearch: scalar.  Returns (N, d) float32.
    compute_dtype controls the operand dtype fed to the MXU (accumulation and
    epilogue are always float32).  Default bf16 halves F HBM traffic when F is
    already bf16 upstream; use float32 for bit-exact ridge numerics.
    """
    N, p = F.shape
    p_w, d = W.shape
    assert p_w == p, "F and W feature dims must match"

    isz = jnp.dtype(compute_dtype).itemsize
    budget = _vmem_budget_bytes()
    f_buf_budget = budget // 4          # one F buffer; double-buffered F <= budget/2

    # --- K (feature) axis ---------------------------------------------------
    # Single K step whenever the full feature extent fits with a >=128-row F
    # tile (true for any realistic p): exact extent, no padding of F, and the
    # (8,128) constraint is satisfied by "block dim == full array dim".
    max_single_p = max(128, f_buf_budget // (128 * isz))
    if p <= max_single_p:
        tk = kp = p
    else:
        # Very large p only: K-tile with a large multiple of 128; relative pad
        # waste < tk/p is small.  K extent stays exact via zero-padding.
        tk = 1024
        kp = _round_up(p, tk)

    # --- N (sample) axis ------------------------------------------------------
    # Size the row tile so each step DMAs ~target_tile_bytes of F.
    tn = _round_up(_cdiv(target_tile_bytes, max(tk * isz, 1)), 128)
    tn = max(128, min(tn, _MAX_TN))
    tn_vmem = max(128, ((f_buf_budget // (tk * isz)) // 128) * 128)
    tn = min(tn, tn_vmem)
    if N >= 256:
        # Keep >=2 row tiles so the "parallel" axis feeds both v7x TensorCores.
        tn = min(tn, _round_up(_cdiv(N, 2), 128))
    tn = min(tn, _round_up(N, 128))

    # --- operand plumbing (no pad / transpose of the big F array) -------------
    f = F if F.dtype == compute_dtype else F.astype(compute_dtype)
    w = W if W.dtype == compute_dtype else W.astype(compute_dtype)
    if kp != p:
        # Only reachable for extremely large p; zero columns contribute nothing.
        f = jnp.pad(f, ((0, 0), (0, kp - p)))
        w = jnp.pad(w, ((0, kp - p), (0, 0)))
    b2 = b.reshape(1, d).astype(jnp.float32)
    scale = jnp.asarray(linesearch, jnp.float32).reshape((1,))

    grid = (_cdiv(N, tn), kp // tk)

    # --- VMEM budget (double-buffered tiles; generation-aware cap) ------------
    need = (2 * tn * tk * isz      # F tile (double-buffered)
            + 2 * tk * d * isz     # W tile
            + 2 * d * 4            # bias
            + 2 * tn * d * 4)      # output/accumulator tile
    vmem_limit = int(min(budget, max(2 * need, 32 * 1024 * 1024)))

    cost = pl.CostEstimate(
        flops=2 * N * p * d,
        transcendentals=0,
        bytes_accessed=N * p * isz + p * d * isz + N * d * 4 + d * 4)

    out = pl.pallas_call(
        ghat_forward_kernel,
        out_shape=jax.ShapeDtypeStruct((N, d), jnp.float32),
        grid=grid,
        in_specs=[
            pl.BlockSpec(memory_space=pltpu.MemorySpace.SMEM),   # line-search scalar
            pl.BlockSpec((tn, tk), lambda i, k: (i, k)),         # F row/K tile
            pl.BlockSpec((tk, d), lambda i, k: (k, 0)),          # W K tile (tiny)
            pl.BlockSpec((1, d), lambda i, k: (0, 0)),           # bias
        ],
        out_specs=pl.BlockSpec((tn, d), lambda i, k: (i, 0)),    # resident accumulator
        compiler_params=pltpu.CompilerParams(
            dimension_semantics=("parallel", "arbitrary"),
            vmem_limit_bytes=vmem_limit),
        cost_estimate=cost,
    )(scale, f, w, b2)
    return out


if __name__ == "__main__":
    key = jax.random.PRNGKey(0)
    k_f, k_w, k_b, k_s = jax.random.split(key, 4)

    # Small but representative shapes: N samples, p random features, d targets.
    # N/tn = 2 row tiles -> both v7x TensorCores get work.
    N, p, d = 1024, 64, 8
    F = jax.random.normal(k_f, (N, p), dtype=jnp.float32)
    # Deterministically "fitted" ridge parameters (synthetic, not a checkpoint).
    W = jax.random.normal(k_w, (p, d), dtype=jnp.float32) * 0.1
    b = jax.random.normal(k_b, (d,), dtype=jnp.float32) * 0.05
    linesearch = jax.random.uniform(k_s, (), dtype=jnp.float32) + 0.5

    ref = linesearch * (F @ W + b)

    # Exact f32-operand path: tight tolerance.
    out_f32 = jax.block_until_ready(
        ghat_gradient_layer_mse_forward(F, W, b, linesearch,
                                        compute_dtype=jnp.float32))
    assert out_f32.shape == (N, d)
    assert jnp.allclose(out_f32, ref, atol=2e-4, rtol=2e-4), "mismatch (f32)"

    # Default bf16-operand path (f32 MXU accumulation): bf16-level tolerance.
    out_bf16 = jax.block_until_ready(
        ghat_gradient_layer_mse_forward(F, W, b, linesearch))
    assert out_bf16.shape == (N, d)
    assert jnp.allclose(out_bf16, ref, atol=5e-2, rtol=5e-2), "mismatch (bf16)"

    # Unaligned shapes exercise the ragged last row tile (no wrapper pad of F).
    N2, p2, d2 = 200, 48, 8
    F2 = jax.random.normal(k_f, (N2, p2), dtype=jnp.float32)
    W2 = jax.random.normal(k_w, (p2, d2), dtype=jnp.float32) * 0.1
    b2 = jax.random.normal(k_b, (d2,), dtype=jnp.float32) * 0.05
    out2 = jax.block_until_ready(
        ghat_gradient_layer_mse_forward(F2, W2, b2, linesearch,
                                        compute_dtype=jnp.float32))
    ref2 = linesearch * (F2 @ W2 + b2)
    assert out2.shape == (N2, d2)
    assert jnp.allclose(out2, ref2, atol=2e-4, rtol=2e-4), "mismatch (ragged case)"

    # TODO(synk): fit_transform (ridge fit + sandwiched_LS_scalar line search)
    # is training-time logic, not part of forward; not ported.

    print("KERNEL_OK")
</pallas_src>

<mosaic_0001>
module attributes {stable_mosaic.version = 11 : i64} {
  func.func @ghat_forward_kernel(%arg0: i32, %arg1: i32, %arg2: memref<1xf32, #tpu.memory_space<smem>>, %arg3: memref<512x64xf32, #tpu.memory_space<vmem>>, %arg4: memref<64x8xf32, #tpu.memory_space<vmem>>, %arg5: memref<1x8xf32, #tpu.memory_space<vmem>>, %arg6: memref<512x8xf32, #tpu.memory_space<vmem>>) attributes {dimension_semantics = [#tpu.dimension_semantics<parallel>, #tpu.dimension_semantics<arbitrary>], iteration_bounds = array<i64: 2, 1>, scalar_prefetch = 0 : i64, scratch_operands = 0 : i64, tpu.core_type = #tpu.core_type<tc>, window_params = [{transform_indices = @transform_0, window_bounds = array<i64: 1>}, {transform_indices = @transform_1, window_bounds = array<i64: 512, 64>}, {transform_indices = @transform_2, window_bounds = array<i64: 64, 8>}, {pipeline_mode = #tpu.pipeline_mode<synchronous>, transform_indices = @transform_3, window_bounds = array<i64: 1, 8>}, {transform_indices = @transform_4, window_bounds = array<i64: 512, 8>}]} {
    %c0 = arith.constant 0 : index
    %c0_0 = arith.constant 0 : index
    %0 = vector.load %arg3[%c0, %c0_0] : memref<512x64xf32, #tpu.memory_space<vmem>>, vector<512x64xf32>
    %c0_1 = arith.constant 0 : index
    %c0_2 = arith.constant 0 : index
    %1 = vector.load %arg4[%c0_1, %c0_2] : memref<64x8xf32, #tpu.memory_space<vmem>>, vector<64x8xf32>
    %cst = arith.constant dense<0.000000e+00> : vector<512x8xf32>
    %2 = tpu.matmul %0, %1, %cst {dimension_numbers = #tpu.dot_dimension_numbers<[1], [0], [0], [1], [0, 0, 1, 1], [], []>} : vector<512x64xf32>, vector<64x8xf32>, vector<512x8xf32> -> vector<512x8xf32>
    %c0_i32 = arith.constant 0 : i32
    %3 = arith.cmpi eq, %arg1, %c0_i32 : i32
    %4 = arith.extui %3 : i1 to i32
    %c0_i32_3 = arith.constant 0 : i32
    %5 = arith.cmpi ne, %4, %c0_i32_3 : i32
    scf.if %5 {
      %c0_8 = arith.constant 0 : index
      %c0_9 = arith.constant 0 : index
      %12 = vector.load %arg6[%c0_8, %c0_9] : memref<512x8xf32, #tpu.memory_space<vmem>>, vector<512x8xf32>
      tpu.vector_store %arg6[%c0_8, %c0_9], %2 {strides = array<i32>} : memref<512x8xf32, #tpu.memory_space<vmem>>, vector<512x8xf32>,
    } else {
    }
    %c0_i32_4 = arith.constant 0 : i32
    %6 = arith.cmpi sgt, %arg1, %c0_i32_4 : i32
    %7 = arith.extui %6 : i1 to i32
    %c0_i32_5 = arith.constant 0 : i32
    %8 = arith.cmpi ne, %7, %c0_i32_5 : i32
    scf.if %8 {
      %c0_8 = arith.constant 0 : index
      %c0_9 = arith.constant 0 : index
      %12 = vector.load %arg6[%c0_8, %c0_9] : memref<512x8xf32, #tpu.memory_space<vmem>>, vector<512x8xf32>
      %13 = arith.addf %12, %2 : vector<512x8xf32>
      %c0_10 = arith.constant 0 : index
      %c0_11 = arith.constant 0 : index
      %14 = vector.load %arg6[%c0_10, %c0_11] : memref<512x8xf32, #tpu.memory_space<vmem>>, vector<512x8xf32>
      tpu.vector_store %arg6[%c0_10, %c0_11], %13 {strides = array<i32>} : memref<512x8xf32, #tpu.memory_space<vmem>>, vector<512x8xf32>,
    } else {
    }
    %c0_i32_6 = arith.constant 0 : i32
    %9 = arith.cmpi eq, %arg1, %c0_i32_6 : i32
    %10 = arith.extui %9 : i1 to i32
    %c0_i32_7 = arith.constant 0 : i32
    %11 = arith.cmpi ne, %10, %c0_i32_7 : i32
    scf.if %11 {
      %c0_8 = arith.constant 0 : index
      %12 = memref.load %arg2[%c0_8] : memref<1xf32, #tpu.memory_space<smem>>
      %c0_9 = arith.constant 0 : index
      %c0_10 = arith.constant 0 : index
      %13 = vector.load %arg6[%c0_9, %c0_10] : memref<512x8xf32, #tpu.memory_space<vmem>>, vector<512x8xf32>
      %c0_11 = arith.constant 0 : index
      %c0_12 = arith.constant 0 : index
      %14 = vector.load %arg5[%c0_11, %c0_12] : memref<1x8xf32, #tpu.memory_space<vmem>>, vector<1x8xf32>
      %15 = vector.broadcast %14 : vector<1x8xf32> to vector<512x8xf32>
      %16 = arith.addf %13, %15 : vector<512x8xf32>
      %17 = vector.broadcast %12 : f32 to vector<512x8xf32>
      %18 = arith.mulf %17, %16 : vector<512x8xf32>
      %c0_13 = arith.constant 0 : index
      %c0_14 = arith.constant 0 : index
      %19 = vector.load %arg6[%c0_13, %c0_14] : memref<512x8xf32, #tpu.memory_space<vmem>>, vector<512x8xf32>
      tpu.vector_store %arg6[%c0_13, %c0_14], %18 {strides = array<i32>} : memref<512x8xf32, #tpu.memory_space<vmem>>, vector<512x8xf32>,
    } else {
    }
    return
  }
  func.func @transform_0(%arg0: i32, %arg1: i32) -> i32 {
    %c0_i32 = arith.constant 0 : i32
    %c0_i32_0 = arith.constant 0 : i32
    return %c0_i32 : i32
  }
  func.func @transform_1(%arg0: i32, %arg1: i32) -> (i32, i32) {
    %c0_i32 = arith.constant 0 : i32
    return %arg0, %arg1 : i32, i32
  }
  func.func @transform_2(%arg0: i32, %arg1: i32) -> (i32, i32) {
    %c0_i32 = arith.constant 0 : i32
    %c0_i32_0 = arith.constant 0 : i32
    return %arg1, %c0_i32 : i32, i32
  }
  func.func @transform_3(%arg0: i32, %arg1: i32) -> (i32, i32) {
    %c0_i32 = arith.constant 0 : i32
    %c0_i32_0 = arith.constant 0 : i32
    %c0_i32_1 = arith.constant 0 : i32
    return %c0_i32, %c0_i32_0 : i32, i32
  }
  func.func @transform_4(%arg0: i32, %arg1: i32) -> (i32, i32) {
    %c0_i32 = arith.constant 0 : i32
    %c0_i32_0 = arith.constant 0 : i32
    return %arg0, %c0_i32 : i32, i32
  }
}

</mosaic_0001>

<llo_original>
// kernel: tpu_custom_call.1
$region0: #{tpu_custom_call.1}
  #allocation0 [shape = 'u32[]', space=smem, size = 0x4, offset = 0x4, fixed_abs, tag = 'smem constant byte address 0x4 - core index']
  #allocation1 [shape = 'u32[144,128]{1,0:T(1,128)}', space=vmem, size = 0x12000, scoped, tag = 'internal scratch']
  #allocation2 [shape = 'f32[1]{0:T(128)S(6)}', space=smem, size = 0x200, scoped, tag = 'scoped memory for tpu_custom_call.1']
  %s0 = inlined_call_operand.<no memory space> [shape: f32[1], index: 0, kind: input, shape index: {}]
  %s1 = inlined_call_operand.vmem [shape: f32[1024,64], index: 1, kind: input, shape index: {}]
  %s2 = inlined_call_operand.vmem [shape: f32[64,8], index: 2, kind: input, shape index: {}]
  %s3 = inlined_call_operand.vmem [shape: f32[1,8], index: 3, kind: input, shape index: {}]
  %s4 = inlined_call_operand.vmem [shape: f32[1024,8], index: 4, kind: output, shape index: {}]
  %s5 = sld [smem:[#allocation0]]
  $region61: #{tpu_custom_call.1} parent=0
    _
  %s7 = ssub.s32 1, %s5
  %s8 = scalar_select 0, %s7, %s5
  %9 = sst [smem:[#allocation2]] %s0
  loop: start=0, step=1, limit=4
  $region2: #{tpu_custom_call.1} parent=0 // loop_pre_header
    _
  $region3: #{tpu_custom_call.1} parent=0 // loop_header
    %s11 = sphi 0, %s15
    %p12 = scmp.ge.s32.totalorder %s11, 4
    %s18 = sphi 0, %s30
    %s19 = sphi 0, %s26
    %s20 = sphi 0, %s18
    %s21 = sphi 0, %s19
    %s22 = sphi 0, %s20
    %s23 = sphi 0, %s21
    %s31 = sphi 0, %s31
    %s33 = sphi 0, %s31
    %s34 = sphi 0, %s33
    %s48 = sphi 0, %s34
    %s56 = sphi 0, %s58
    %s59 = sphi 0, %s56
    %s60 = sphi 0, %s59
    %s76 = sphi 0, %s60
    %s82 = sphi 0, %s84
    %s85 = sphi 0, %s82
    %s86 = sphi 0, %s85
    %s102 = sphi 0, %s86
    %s106 = sphi 0, %s106
    %s108 = sphi 0, %s106
    %s109 = sphi 0, %s108
    %s123 = sphi 0, %s109
    %s129 = sphi 0, %s131
    %s132 = sphi 0, %s129
    %s133 = sphi 0, %s132
    %s149 = sphi 0, %s133
  $region4: #{tpu_custom_call.1} parent=0 // loop_header_branch
    %14 = sbr.rel (%p12) target = $region8
  $region5: #{tpu_custom_call.1} parent=0 // loop_body
    %s16 = ssub.s32 %s11, 1
    %s17 = ssub.s32 %s11, 2
    %s24 = sadd.s32 1, %s19
    %p25 = scmp.ge.s32.totalorder %s24, 1
    %s26 = scalar_select %p25, 0, %s24
    %s27 = sadd.s32 1, %s18
    %s28 = scalar_select %p25, %s27, %s18
    %p29 = scmp.ge.s32.totalorder %s28, 2
    %s30 = scalar_select %p29, 0, %s28
    %s32 = sadd.s32 %s31, 1
    %p35 = scmp.eq.s32.totalorder %s11, 1
    %p36 = scmp.ne.s32.totalorder %s31, %s33
    %p37 = scmp.eq.s32.totalorder %s11, 0
    %p38 = por %p36, %p37
    %p39 = scmp.ne.s32.totalorder %s31, %s33
    %p40 = scmp.eq.s32.totalorder %s16, 1
    %p41 = por %p39, %p40
    %p42 = scmp.ne.s32.totalorder %s33, %s34
    %p43 = scmp.eq.s32.totalorder %s16, 0
    %p44 = por %p42, %p43
    %p45 = scmp.ne.s32.totalorder %s33, %s34
    %p46 = scmp.eq.s32.totalorder %s17, 1
    %p47 = por %p45, %p46
    %p49 = scmp.ne.s32.totalorder %s34, %s48
    %p50 = scmp.eq.s32.totalorder %s17, 0
    %p51 = por %p49, %p50
    %s52 = ssub.s32 %s18, %s30
    %s53 = ssub.s32 %s19, %s26
    %s54 = sor.u32 %s52, %s53
    %p55 = scmp.eq.s32.totalorder %s54, 0
    %s57 = sadd.s32 %s56, 1
    %s58 = scalar_select %p55, %s56, %s57
    %p61 = pneg %p55
    %p62 = scmp.eq.s32.totalorder %s11, 1
    %p63 = por %p61, %p62
    %p64 = scmp.ne.s32.totalorder %s56, %s59
    %p65 = scmp.eq.s32.totalorder %s11, 0
    %p66 = por %p64, %p65
    %p67 = scmp.ne.s32.totalorder %s56, %s59
    %p68 = scmp.eq.s32.totalorder %s16, 1
    %p69 = por %p67, %p68
    %p70 = scmp.ne.s32.totalorder %s59, %s60
    %p71 = scmp.eq.s32.totalorder %s16, 0
    %p72 = por %p70, %p71
    %p73 = scmp.ne.s32.totalorder %s59, %s60
    %p74 = scmp.eq.s32.totalorder %s17, 1
    %p75 = por %p73, %p74
    %p77 = scmp.ne.s32.totalorder %s60, %s76
    %p78 = scmp.eq.s32.totalorder %s17, 0
    %p79 = por %p77, %p78
    %s80 = ssub.s32 %s19, %s26
    %p81 = scmp.eq.s32.totalorder %s80, 0
    %s83 = sadd.s32 %s82, 1
    %s84 = scalar_select %p81, %s82, %s83
    %p87 = pneg %p81
    %p88 = scmp.eq.s32.totalorder %s11, 1
    %p89 = por %p87, %p88
    %p90 = scmp.ne.s32.totalorder %s82, %s85
    %p91 = scmp.eq.s32.totalorder %s11, 0
    %p92 = por %p90, %p91
    %p93 = scmp.ne.s32.totalorder %s82, %s85
    %p94 = scmp.eq.s32.totalorder %s16, 1
    %p95 = por %p93, %p94
    %p96 = scmp.ne.s32.totalorder %s85, %s86
    %p97 = scmp.eq.s32.totalorder %s16, 0
    %p98 = por %p96, %p97
    %p99 = scmp.ne.s32.totalorder %s85, %s86
    %p100 = scmp.eq.s32.totalorder %s17, 1
    %p101 = por %p99, %p100
    %p103 = scmp.ne.s32.totalorder %s86, %s102
    %p104 = scmp.eq.s32.totalorder %s17, 0
    %p105 = por %p103, %p104
    %s107 = sadd.s32 %s106, 1
    %p110 = scmp.eq.s32.totalorder %s11, 1
    %p111 = scmp.ne.s32.totalorder %s106, %s108
    %p112 = scmp.eq.s32.totalorder %s11, 0
    %p113 = por %p111, %p112
    %p114 = scmp.ne.s32.totalorder %s106, %s108
    %p115 = scmp.eq.s32.totalorder %s16, 1
    %p116 = por %p114, %p115
    %p117 = scmp.ne.s32.totalorder %s108, %s109
    %p118 = scmp.eq.s32.totalorder %s16, 0
    %p119 = por %p117, %p118
    %p120 = scmp.ne.s32.totalorder %s108, %s109
    %p121 = scmp.eq.s32.totalorder %s17, 1
    %p122 = por %p120, %p121
    %p124 = scmp.ne.s32.totalorder %s109, %s123
    %p125 = scmp.eq.s32.totalorder %s17, 0
    %p126 = por %p124, %p125
    %s127 = ssub.s32 %s18, %s30
    %p128 = scmp.eq.s32.totalorder %s127, 0
    %s130 = sadd.s32 %s129, 1
    %s131 = scalar_select %p128, %s129, %s130
    %p134 = pneg %p128
    %p135 = scmp.eq.s32.totalorder %s11, 1
    %p136 = por %p134, %p135
    %p137 = scmp.ne.s32.totalorder %s129, %s132
    %p138 = scmp.eq.s32.totalorder %s11, 0
    %p139 = por %p137, %p138
    %p140 = scmp.ne.s32.totalorder %s129, %s132
    %p141 = scmp.eq.s32.totalorder %s16, 1
    %p142 = por %p140, %p141
    %p143 = scmp.ne.s32.totalorder %s132, %s133
    %p144 = scmp.eq.s32.totalorder %s16, 0
    %p145 = por %p143, %p144
    %p146 = scmp.ne.s32.totalorder %s132, %s133
    %p147 = scmp.eq.s32.totalorder %s17, 1
    %p148 = por %p146, %p147
    %p150 = scmp.ne.s32.totalorder %s133, %s149
    %p151 = scmp.eq.s32.totalorder %s17, 0
    %p152 = por %p150, %p151
    %p153 = scmp.le.s32.totalorder 1, %s11
    %p154 = scmp.lt.s32.totalorder %s11, 3
    %p155 = pnand %p153, %p154
    %p156 = pneg %p155
    // Predicated region
    $region9: #{tpu_custom_call.1} parent=5 // pred_check
      _
    $region10: #{tpu_custom_call.1} parent=5 // pred_check_branch
      %158 = sbr.rel (%p155) target = $region12
    $region11: #{tpu_custom_call.1} parent=5 // pred_region
      %s159 = ssub.s32 %s11, 1
      // Predicated region
      $region13: #{tpu_custom_call.1} parent=11 // pred_check
        %p160 = pneg %p44
      $region14: #{tpu_custom_call.1} parent=11 // pred_check_branch
        %162 = sbr.rel (%p160) target = $region16
      $region15: #{tpu_custom_call.1} parent=11 // pred_region
        _
      $region16: #{tpu_custom_call.1} parent=11 // pred_fallthru
        _
      // Predicated region
      $region17: #{tpu_custom_call.1} parent=11 // pred_check
        %p163 = pneg %p98
      $region18: #{tpu_custom_call.1} parent=11 // pred_check_branch
        %165 = sbr.rel (%p163) target = $region20
      $region19: #{tpu_custom_call.1} parent=11 // pred_region
        %s166 = smul.u32 8, %s21
        %p167 = scmp.lt.s32.totalorder %s166, 7
        %s168 = scalar_select %p167, %s166, 7
        %s169 = smul.addr %s168, 8
        %s170 = scalar_lea.vmem %s2, %s169
        %s171 = smul.u32 8, %s21
      $region20: #{tpu_custom_call.1} parent=11 // pred_fallthru
        _
      // Predicated region
      $region21: #{tpu_custom_call.1} parent=11 // pred_check
        %p172 = pneg %p119
      $region22: #{tpu_custom_call.1} parent=11 // pred_check_branch
        %174 = sbr.rel (%p172) target = $region24
      $region23: #{tpu_custom_call.1} parent=11 // pred_region
        _
      $region24: #{tpu_custom_call.1} parent=11 // pred_fallthru
        _
    $region12: #{tpu_custom_call.1} parent=5 // pred_fallthru
      _
    %p175 = scmp.lt.s32.totalorder %s11, 2
    // Predicated region
    $region25: #{tpu_custom_call.1} parent=5 // pred_check
      %p176 = pneg %p175
    $region26: #{tpu_custom_call.1} parent=5 // pred_check_branch
      %178 = sbr.rel (%p176) target = $region28
    $region27: #{tpu_custom_call.1} parent=5 // pred_region
      // Predicated region
      $region29: #{tpu_custom_call.1} parent=27 // pred_check
        %p179 = pneg %p66
      $region30: #{tpu_custom_call.1} parent=27 // pred_check_branch
        %181 = sbr.rel (%p179) target = $region32
      $region31: #{tpu_custom_call.1} parent=27 // pred_region
        %s182 = smul.u32 64, %s18
        %p183 = scmp.lt.s32.totalorder %s182, 127
        %s184 = scalar_select %p183, %s182, 127
        %p185 = scmp.lt.s32.totalorder %s19, 0
        %s186 = scalar_select %p185, %s19, 0
        %s187 = sadd.s32 %s186, %s184
        %s188 = smul.addr %s187, 8
        %s189 = scalar_lea.vmem %s1, %s188
        %s190 = smul.u32 64, %s18
      $region32: #{tpu_custom_call.1} parent=27 // pred_fallthru
        _
    $region28: #{tpu_custom_call.1} parent=5 // pred_fallthru
      _
    %p191 = scmp.le.s32.totalorder 1, %s11
    %p192 = scmp.lt.s32.totalorder %s11, 3
    %p193 = pnand %p191, %p192
    %p194 = pneg %p193
    // Predicated region
    $region33: #{tpu_custom_call.1} parent=5 // pred_check
      _
    $region34: #{tpu_custom_call.1} parent=5 // pred_check_branch
      %196 = sbr.rel (%p193) target = $region36
    $region35: #{tpu_custom_call.1} parent=5 // pred_region
      %s197 = ssub.s32 %s11, 1
      %p198 = pneg %p44
      %p199 = pneg %p41
      %s200 = smul.u32 64, %s20
      %p201 = scmp.lt.s32.totalorder %s200, 127
      %s202 = scalar_select %p201, %s200, 127
      %p203 = scmp.lt.s32.totalorder %s21, 0
      %s204 = scalar_select %p203, %s21, 0
      %s205 = sadd.s32 %s204, %s202
      %s206 = smul.addr %s205, 8
      %s207 = scalar_lea.vmem %s1, %s206
      %p208 = pneg %p72
      %p209 = pneg %p69
      %s210 = smul.u32 8, %s21
      %p211 = scmp.lt.s32.totalorder %s210, 7
      %s212 = scalar_select %p211, %s210, 7
      %s213 = smul.addr %s212, 8
      %s214 = scalar_lea.vmem %s2, %s213
      %p215 = pneg %p98
      %p216 = pneg %p95
      %p217 = pneg %p119
      %p218 = pneg %p116
      %p219 = pneg %p145
      %p220 = pneg %p142
      %s221 = smul.u32 64, %s20
      %p222 = scmp.lt.s32.totalorder %s221, 127
      %s223 = scalar_select %p222, %s221, 127
      %s224 = smul.addr %s223, 8
      %s225 = scalar_lea.vmem %s4, %s224
      %s226 = smul.u32 64, %s20
      %p227 = scmp.lt.s32.totalorder %s226, 127
      %s228 = scalar_select %p227, %s226, 127
      %p229 = scmp.lt.s32.totalorder %s21, 0
      %s230 = scalar_select %p229, %s21, 0
      %s231 = sadd.s32 %s230, %s228
      %s232 = smul.addr %s231, 8
      %s233 = scalar_lea.vmem %s1, %s232
      %s234 = smul.u32 64, %s20
      %s235 = smul.u32 8, %s21
      %p236 = scmp.lt.s32.totalorder %s235, 7
      %s237 = scalar_select %p236, %s235, 7
      %s238 = smul.addr %s237, 8
      %s239 = scalar_lea.vmem %s2, %s238
      %s240 = smul.u32 8, %s21
      %s241 = smul.u32 64, %s20
      %p242 = scmp.lt.s32.totalorder %s241, 127
      %s243 = scalar_select %p242, %s241, 127
      %s244 = smul.addr %s243, 8
      %s245 = scalar_lea.vmem %s4, %s244
      %s246 = smul.u32 64, %s20
      %v247 = vld [vmem:[%s233] sm:$0xff]
      %v248 = vld [vmem:[%s233 + $0x8] sm:$0xff]
      %v249 = vld [vmem:[%s233 + $0x10] sm:$0xff]
      %v250 = vld [vmem:[%s233 + $0x18] sm:$0xff]
      %v251 = vld [vmem:[%s233 + $0x20] sm:$0xff]
      %v252 = vld [vmem:[%s233 + $0x28] sm:$0xff]
      %v253 = vld [vmem:[%s233 + $0x30] sm:$0xff]
      %v254 = vld [vmem:[%s233 + $0x38] sm:$0xff]
      %v255 = vld [vmem:[%s233 + $0x40] sm:$0xff]
      %v256 = vld [vmem:[%s233 + $0x48] sm:$0xff]
      %v257 = vld [vmem:[%s233 + $0x50] sm:$0xff]
      %v258 = vld [vmem:[%s233 + $0x58] sm:$0xff]
      %v259 = vld [vmem:[%s233 + $0x60] sm:$0xff]
      %v260 = vld [vmem:[%s233 + $0x68] sm:$0xff]
      %v261 = vld [vmem:[%s233 + $0x70] sm:$0xff]
      %v262 = vld [vmem:[%s233 + $0x78] sm:$0xff]
      %v263 = vld [vmem:[%s233 + $0x80] sm:$0xff]
      %v264 = vld [vmem:[%s233 + $0x88] sm:$0xff]
      %v265 = vld [vmem:[%s233 + $0x90] sm:$0xff]
      %v266 = vld [vmem:[%s233 + $0x98] sm:$0xff]
      %v267 = vld [vmem:[%s233 + $0xa0] sm:$0xff]
      %v268 = vld [vmem:[%s233 + $0xa8] sm:$0xff]
      %v269 = vld [vmem:[%s233 + $0xb0] sm:$0xff]
      %v270 = vld [vmem:[%s233 + $0xb8] sm:$0xff]
      %v271 = vld [vmem:[%s233 + $0xc0] sm:$0xff]
      %v272 = vld [vmem:[%s233 + $0xc8] sm:$0xff]
      %v273 = vld [vmem:[%s233 + $0xd0] sm:$0xff]
      %v274 = vld [vmem:[%s233 + $0xd8] sm:$0xff]
      %v275 = vld [vmem:[%s233 + $0xe0] sm:$0xff]
      %v276 = vld [vmem:[%s233 + $0xe8] sm:$0xff]
      %v277 = vld [vmem:[%s233 + $0xf0] sm:$0xff]
      %v278 = vld [vmem:[%s233 + $0xf8] sm:$0xff]
      %v279 = vld [vmem:[%s233 + $0x100] sm:$0xff]
      %v280 = vld [vmem:[%s233 + $0x108] sm:$0xff]
      %v281 = vld [vmem:[%s233 + $0x110] sm:$0xff]
      %v282 = vld [vmem:[%s233 + $0x118] sm:$0xff]
      %v283 = vld [vmem:[%s233 + $0x120] sm:$0xff]
      %v284 = vld [vmem:[%s233 + $0x128] sm:$0xff]
      %v285 = vld [vmem:[%s233 + $0x130] sm:$0xff]
      %v286 = vld [vmem:[%s233 + $0x138] sm:$0xff]
      %v287 = vld [vmem:[%s233 + $0x140] sm:$0xff]
      %v288 = vld [vmem:[%s233 + $0x148] sm:$0xff]
      %v289 = vld [vmem:[%s233 + $0x150] sm:$0xff]
      %v290 = vld [vmem:[%s233 + $0x158] sm:$0xff]
      %v291 = vld [vmem:[%s233 + $0x160] sm:$0xff]
      %v292 = vld [vmem:[%s233 + $0x168] sm:$0xff]
      %v293 = vld [vmem:[%s233 + $0x170] sm:$0xff]
      %v294 = vld [vmem:[%s233 + $0x178] sm:$0xff]
      %v295 = vld [vmem:[%s233 + $0x180] sm:$0xff]
      %v296 = vld [vmem:[%s233 + $0x188] sm:$0xff]
      %v297 = vld [vmem:[%s233 + $0x190] sm:$0xff]
      %v298 = vld [vmem:[%s233 + $0x198] sm:$0xff]
      %v299 = vld [vmem:[%s233 + $0x1a0] sm:$0xff]
      %v300 = vld [vmem:[%s233 + $0x1a8] sm:$0xff]
      %v301 = vld [vmem:[%s233 + $0x1b0] sm:$0xff]
      %v302 = vld [vmem:[%s233 + $0x1b8] sm:$0xff]
      %v303 = vld [vmem:[%s233 + $0x1c0] sm:$0xff]
      %v304 = vld [vmem:[%s233 + $0x1c8] sm:$0xff]
      %v305 = vld [vmem:[%s233 + $0x1d0] sm:$0xff]
      %v306 = vld [vmem:[%s233 + $0x1d8] sm:$0xff]
      %v307 = vld [vmem:[%s233 + $0x1e0] sm:$0xff]
      %v308 = vld [vmem:[%s233 + $0x1e8] sm:$0xff]
      %v309 = vld [vmem:[%s233 + $0x1f0] sm:$0xff]
      %v310 = vld [vmem:[%s233 + $0x1f8] sm:$0xff]
      %v311 = vld [vmem:[%s239] sm:$0xff]
      %v312 = vld [vmem:[%s239 + $0x8] sm:$0xff]
      %v313 = vld [vmem:[%s239 + $0x10] sm:$0xff]
      %v314 = vld [vmem:[%s239 + $0x18] sm:$0xff]
      %v315 = vld [vmem:[%s239 + $0x20] sm:$0xff]
      %v316 = vld [vmem:[%s239 + $0x28] sm:$0xff]
      %v317 = vld [vmem:[%s239 + $0x30] sm:$0xff]
      %v318 = vld [vmem:[%s239 + $0x38] sm:$0xff]
      %vm319 = vcmask 523264
      %v321 = vsel %vm319, %v247, 0
      %v324 = vsel %vm319, %v248, 0
      %v327 = vsel %vm319, %v249, 0
      %v330 = vsel %vm319, %v250, 0
      %v333 = vsel %vm319, %v251, 0
      %v336 = vsel %vm319, %v252, 0
      %v339 = vsel %vm319, %v253, 0
      %v342 = vsel %vm319, %v254, 0
      %v345 = vsel %vm319, %v255, 0
      %v348 = vsel %vm319, %v256, 0
      %v351 = vsel %vm319, %v257, 0
      %v354 = vsel %vm319, %v258, 0
      %v357 = vsel %vm319, %v259, 0
      %v360 = vsel %vm319, %v260, 0
      %v363 = vsel %vm319, %v261, 0
      %v366 = vsel %vm319, %v262, 0
      %v369 = vsel %vm319, %v263, 0
      %v372 = vsel %vm319, %v264, 0
      %v375 = vsel %vm319, %v265, 0
      %v378 = vsel %vm319, %v266, 0
      %v381 = vsel %vm319, %v267, 0
      %v384 = vsel %vm319, %v268, 0
      %v387 = vsel %vm319, %v269, 0
      %v390 = vsel %vm319, %v270, 0
      %v393 = vsel %vm319, %v271, 0
      %v396 = vsel %vm319, %v272, 0
      %v399 = vsel %vm319, %v273, 0
      %v402 = vsel %vm319, %v274, 0
      %v405 = vsel %vm319, %v275, 0
      %v408 = vsel %vm319, %v276, 0
      %v411 = vsel %vm319, %v277, 0
      %v414 = vsel %vm319, %v278, 0
      %v417 = vsel %vm319, %v279, 0
      %v420 = vsel %vm319, %v280, 0
      %v423 = vsel %vm319, %v281, 0
      %v426 = vsel %vm319, %v282, 0
      %v429 = vsel %vm319, %v283, 0
      %v432 = vsel %vm319, %v284, 0
      %v435 = vsel %vm319, %v285, 0
      %v438 = vsel %vm319, %v286, 0
      %v441 = vsel %vm319, %v287, 0
      %v444 = vsel %vm319, %v288, 0
      %v447 = vsel %vm319, %v289, 0
      %v450 = vsel %vm319, %v290, 0
      %v453 = vsel %vm319, %v291, 0
      %v456 = vsel %vm319, %v292, 0
      %v459 = vsel %vm319, %v293, 0
      %v462 = vsel %vm319, %v294, 0
      %v465 = vsel %vm319, %v295, 0
      %v468 = vsel %vm319, %v296, 0
      %v471 = vsel %vm319, %v297, 0
      %v474 = vsel %vm319, %v298, 0
      %v477 = vsel %vm319, %v299, 0
      %v480 = vsel %vm319, %v300, 0
      %v483 = vsel %vm319, %v301, 0
      %v486 = vsel %vm319, %v302, 0
      %v489 = vsel %vm319, %v303, 0
      %v492 = vsel %vm319, %v304, 0
      %v495 = vsel %vm319, %v305, 0
      %v498 = vsel %vm319, %v306, 0
      %v501 = vsel %vm319, %v307, 0
      %v504 = vsel %vm319, %v308, 0
      %v507 = vsel %vm319, %v309, 0
      %v510 = vsel %vm319, %v310, 0
      %512 = vmatprep.subr.mxu0 0.0
      %513 = vmatpush1.msra.mxu0 0.0
      %514 = vmatprep.subr.mxu0 0.0
      %515 = vmatpush1.msra.mxu0 0.0
      %516 = vmatprep.subr.mxu0 0.0
      %517 = vmatpush1.msra.mxu0 0.0
      %518 = vmatprep.subr.mxu0 0.0
      %519 = vmatpush1.msra.mxu0 0.0
      %520 = vmatprep.subr.mxu0 0.0
      %521 = vmatpush1.msra.mxu0 0.0
      %522 = vmatprep.subr.mxu0 0.0
      %523 = vmatpush1.msra.mxu0 0.0
      %524 = vmatprep.subr.mxu0 0.0
      %525 = vmatpush1.msra.mxu0 0.0
      %526 = vmatprep.subr.mxu0 0.0
      %527 = vmatpush1.msra.mxu0 0.0
      %528 = vmatprep.subr.mxu0 0.0
      %529 = vmatpush1.msra.mxu0 %v318
      %530 = vmatprep.subr.mxu0 0.0
      %531 = vmatpush1.msra.mxu0 %v317
      %532 = vmatprep.subr.mxu0 0.0
      %533 = vmatpush1.msra.mxu0 %v316
      %534 = vmatprep.subr.mxu0 0.0
      %535 = vmatpush1.msra.mxu0 %v315
      %536 = vmatprep.subr.mxu0 0.0
      %537 = vmatpush1.msra.mxu0 %v314
      %538 = vmatprep.subr.mxu0 0.0
      %539 = vmatpush1.msra.mxu0 %v313
      %540 = vmatprep.subr.mxu0 0.0
      %541 = vmatpush1.msra.mxu0 %v312
      %542 = vmatprep.subr.mxu0 0.0
      %543 = vmatpush1.msra.mxu0 %v311
      %544 = vmatprep.subr.mxu0 0.0
      %545 = vmatpush2.msra.mxu0 0.0
      %546 = vmatprep.subr.mxu0 0.0
      %547 = vmatpush2.msra.mxu0 0.0
      %548 = vmatprep.subr.mxu0 0.0
      %549 = vmatpush2.msra.mxu0 0.0
      %550 = vmatprep.subr.mxu0 0.0
      %551 = vmatpush2.msra.mxu0 0.0
      %552 = vmatprep.subr.mxu0 0.0
      %553 = vmatpush2.msra.mxu0 0.0
      %554 = vmatprep.subr.mxu0 0.0
      %555 = vmatpush2.msra.mxu0 0.0
      %556 = vmatprep.subr.mxu0 0.0
      %557 = vmatpush2.msra.mxu0 0.0
      %558 = vmatprep.subr.mxu0 0.0
      %559 = vmatpush2.msra.mxu0 0.0
      %560 = vmatprep.subr.mxu0 0.0
      %561 = vmatpush2.msra.mxu0 0.0
      %562 = vmatprep.subr.mxu0 0.0
      %563 = vmatpush2.msra.mxu0 0.0
      %564 = vmatprep.subr.mxu0 0.0
      %565 = vmatpush2.msra.mxu0 0.0
      %566 = vmatprep.subr.mxu0 0.0
      %567 = vmatpush2.msra.mxu0 0.0
      %568 = vmatprep.subr.mxu0 0.0
      %569 = vmatpush2.msra.mxu0 0.0
      %570 = vmatprep.subr.mxu0 0.0
      %571 = vmatpush2.msra.mxu0 0.0
      %572 = vmatprep.subr.mxu0 0.0
      %573 = vmatpush2.msra.mxu0 0.0
      %574 = vmatprep.subr.mxu0 0.0
      %575 = vmatpush2.msra.mxu0 0.0
      %576 = vmatprep.mubr.f32.mxu0 0.0
      %577 = vmatmul.mubr.f32.gmra.mxu0 %v321
      %v578 = vpop.f32.mrf.mxu0
      %v579 = vadd.f32 0.0, %v578
      %v580 = vpop.f32.mrf.mxu0
      %581 = vmatprep.mubr.f32.mxu0 0.0
      %582 = vmatmul.mubr.f32.gmra.mxu0 %v324
      %v583 = vpop.f32.mrf.mxu0
      %v584 = vadd.f32 0.0, %v583
      %v585 = vpop.f32.mrf.mxu0
      %586 = vmatprep.mubr.f32.mxu0 0.0
      %587 = vmatmul.mubr.f32.gmra.mxu0 %v327
      %v588 = vpop.f32.mrf.mxu0
      %v589 = vadd.f32 0.0, %v588
      %v590 = vpop.f32.mrf.mxu0
      %591 = vmatprep.mubr.f32.mxu0 0.0
      %592 = vmatmul.mubr.f32.gmra.mxu0 %v330
      %v593 = vpop.f32.mrf.mxu0
      %v594 = vadd.f32 0.0, %v593
      %v595 = vpop.f32.mrf.mxu0
      %596 = vmatprep.mubr.f32.mxu0 0.0
      %597 = vmatmul.mubr.f32.gmra.mxu0 %v333
      %v598 = vpop.f32.mrf.mxu0
      %v599 = vadd.f32 0.0, %v598
      %v600 = vpop.f32.mrf.mxu0
      %601 = vmatprep.mubr.f32.mxu0 0.0
      %602 = vmatmul.mubr.f32.gmra.mxu0 %v336
      %v603 = vpop.f32.mrf.mxu0
      %v604 = vadd.f32 0.0, %v603
      %v605 = vpop.f32.mrf.mxu0
      %606 = vmatprep.mubr.f32.mxu0 0.0
      %607 = vmatmul.mubr.f32.gmra.mxu0 %v339
      %v608 = vpop.f32.mrf.mxu0
      %v609 = vadd.f32 0.0, %v608
      %v610 = vpop.f32.mrf.mxu0
      %611 = vmatprep.mubr.f32.mxu0 0.0
      %612 = vmatmul.mubr.f32.gmra.mxu0 %v342
      %v613 = vpop.f32.mrf.mxu0
      %v614 = vadd.f32 0.0, %v613
      %v615 = vpop.f32.mrf.mxu0
      %616 = vmatprep.mubr.f32.mxu0 0.0
      %617 = vmatmul.mubr.f32.gmra.mxu0 %v345
      %v618 = vpop.f32.mrf.mxu0
      %v619 = vadd.f32 0.0, %v618
      %v620 = vpop.f32.mrf.mxu0
      %621 = vmatprep.mubr.f32.mxu0 0.0
      %622 = vmatmul.mubr.f32.gmra.mxu0 %v348
      %v623 = vpop.f32.mrf.mxu0
      %v624 = vadd.f32 0.0, %v623
      %v625 = vpop.f32.mrf.mxu0
      %626 = vmatprep.mubr.f32.mxu0 0.0
      %627 = vmatmul.mubr.f32.gmra.mxu0 %v351
      %v628 = vpop.f32.mrf.mxu0
      %v629 = vadd.f32 0.0, %v628
      %v630 = vpop.f32.mrf.mxu0
      %631 = vmatprep.mubr.f32.mxu0 0.0
      %632 = vmatmul.mubr.f32.gmra.mxu0 %v354
      %v633 = vpop.f32.mrf.mxu0
      %v634 = vadd.f32 0.0, %v633
      %v635 = vpop.f32.mrf.mxu0
      %636 = vmatprep.mubr.f32.mxu0 0.0
      %637 = vmatmul.mubr.f32.gmra.mxu0 %v357
      %v638 = vpop.f32.mrf.mxu0
      %v639 = vadd.f32 0.0, %v638
      %v640 = vpop.f32.mrf.mxu0
      %641 = vmatprep.mubr.f32.mxu0 0.0
      %642 = vmatmul.mubr.f32.gmra.mxu0 %v360
      %v643 = vpop.f32.mrf.mxu0
      %v644 = vadd.f32 0.0, %v643
      %v645 = vpop.f32.mrf.mxu0
      %646 = vmatprep.mubr.f32.mxu0 0.0
      %647 = vmatmul.mubr.f32.gmra.mxu0 %v363
      %v648 = vpop.f32.mrf.mxu0
      %v649 = vadd.f32 0.0, %v648
      %v650 = vpop.f32.mrf.mxu0
      %651 = vmatprep.mubr.f32.mxu0 0.0
      %652 = vmatmul.mubr.f32.gmra.mxu0 %v366
      %v653 = vpop.f32.mrf.mxu0
      %v654 = vadd.f32 0.0, %v653
      %v655 = vpop.f32.mrf.mxu0
      %656 = vmatprep.mubr.f32.mxu0 0.0
      %657 = vmatmul.mubr.f32.gmra.mxu0 %v369
      %v658 = vpop.f32.mrf.mxu0
      %v659 = vadd.f32 0.0, %v658
      %v660 = vpop.f32.mrf.mxu0
      %661 = vmatprep.mubr.f32.mxu0 0.0
      %662 = vmatmul.mubr.f32.gmra.mxu0 %v372
      %v663 = vpop.f32.mrf.mxu0
      %v664 = vadd.f32 0.0, %v663
      %v665 = vpop.f32.mrf.mxu0
      %666 = vmatprep.mubr.f32.mxu0 0.0
      %667 = vmatmul.mubr.f32.gmra.mxu0 %v375
      %v668 = vpop.f32.mrf.mxu0
      %v669 = vadd.f32 0.0, %v668
      %v670 = vpop.f32.mrf.mxu0
      %671 = vmatprep.mubr.f32.mxu0 0.0
      %672 = vmatmul.mubr.f32.gmra.mxu0 %v378
      %v673 = vpop.f32.mrf.mxu0
      %v674 = vadd.f32 0.0, %v673
      %v675 = vpop.f32.mrf.mxu0
      %676 = vmatprep.mubr.f32.mxu0 0.0
      %677 = vmatmul.mubr.f32.gmra.mxu0 %v381
      %v678 = vpop.f32.mrf.mxu0
      %v679 = vadd.f32 0.0, %v678
      %v680 = vpop.f32.mrf.mxu0
      %681 = vmatprep.mubr.f32.mxu0 0.0
      %682 = vmatmul.mubr.f32.gmra.mxu0 %v384
      %v683 = vpop.f32.mrf.mxu0
      %v684 = vadd.f32 0.0, %v683
      %v685 = vpop.f32.mrf.mxu0
      %686 = vmatprep.mubr.f32.mxu0 0.0
      %687 = vmatmul.mubr.f32.gmra.mxu0 %v387
      %v688 = vpop.f32.mrf.mxu0
      %v689 = vadd.f32 0.0, %v688
      %v690 = vpop.f32.mrf.mxu0
      %691 = vmatprep.mubr.f32.mxu0 0.0
      %692 = vmatmul.mubr.f32.gmra.mxu0 %v390
      %v693 = vpop.f32.mrf.mxu0
      %v694 = vadd.f32 0.0, %v693
      %v695 = vpop.f32.mrf.mxu0
      %696 = vmatprep.mubr.f32.mxu0 0.0
      %697 = vmatmul.mubr.f32.gmra.mxu0 %v393
      %v698 = vpop.f32.mrf.mxu0
      %v699 = vadd.f32 0.0, %v698
      %v700 = vpop.f32.mrf.mxu0
      %701 = vmatprep.mubr.f32.mxu0 0.0
      %702 = vmatmul.mubr.f32.gmra.mxu0 %v396
      %v703 = vpop.f32.mrf.mxu0
      %v704 = vadd.f32 0.0, %v703
      %v705 = vpop.f32.mrf.mxu0
      %706 = vmatprep.mubr.f32.mxu0 0.0
      %707 = vmatmul.mubr.f32.gmra.mxu0 %v399
      %v708 = vpop.f32.mrf.mxu0
      %v709 = vadd.f32 0.0, %v708
      %v710 = vpop.f32.mrf.mxu0
      %711 = vmatprep.mubr.f32.mxu0 0.0
      %712 = vmatmul.mubr.f32.gmra.mxu0 %v402
      %v713 = vpop.f32.mrf.mxu0
      %v714 = vadd.f32 0.0, %v713
      %v715 = vpop.f32.mrf.mxu0
      %716 = vmatprep.mubr.f32.mxu0 0.0
      %717 = vmatmul.mubr.f32.gmra.mxu0 %v405
      %v718 = vpop.f32.mrf.mxu0
      %v719 = vadd.f32 0.0, %v718
      %v720 = vpop.f32.mrf.mxu0
      %721 = vmatprep.mubr.f32.mxu0 0.0
      %722 = vmatmul.mubr.f32.gmra.mxu0 %v408
      %v723 = vpop.f32.mrf.mxu0
      %v724 = vadd.f32 0.0, %v723
      %v725 = vpop.f32.mrf.mxu0
      %726 = vmatprep.mubr.f32.mxu0 0.0
      %727 = vmatmul.mubr.f32.gmra.mxu0 %v411
      %v728 = vpop.f32.mrf.mxu0
      %v729 = vadd.f32 0.0, %v728
      %v730 = vpop.f32.mrf.mxu0
      %731 = vmatprep.mubr.f32.mxu0 0.0
      %732 = vmatmul.mubr.f32.gmra.mxu0 %v414
      %v733 = vpop.f32.mrf.mxu0
      %v734 = vadd.f32 0.0, %v733
      %v735 = vpop.f32.mrf.mxu0
      %736 = vmatprep.mubr.f32.mxu0 0.0
      %737 = vmatmul.mubr.f32.gmra.mxu0 %v417
      %v738 = vpop.f32.mrf.mxu0
      %v739 = vadd.f32 0.0, %v738
      %v740 = vpop.f32.mrf.mxu0
      %741 = vmatprep.mubr.f32.mxu0 0.0
      %742 = vmatmul.mubr.f32.gmra.mxu0 %v420
      %v743 = vpop.f32.mrf.mxu0
      %v744 = vadd.f32 0.0, %v743
      %v745 = vpop.f32.mrf.mxu0
      %746 = vmatprep.mubr.f32.mxu0 0.0
      %747 = vmatmul.mubr.f32.gmra.mxu0 %v423
      %v748 = vpop.f32.mrf.mxu0
      %v749 = vadd.f32 0.0, %v748
      %v750 = vpop.f32.mrf.mxu0
      %751 = vmatprep.mubr.f32.mxu0 0.0
      %752 = vmatmul.mubr.f32.gmra.mxu0 %v426
      %v753 = vpop.f32.mrf.mxu0
      %v754 = vadd.f32 0.0, %v753
      %v755 = vpop.f32.mrf.mxu0
      %756 = vmatprep.mubr.f32.mxu0 0.0
      %757 = vmatmul.mubr.f32.gmra.mxu0 %v429
      %v758 = vpop.f32.mrf.mxu0
      %v759 = vadd.f32 0.0, %v758
      %v760 = vpop.f32.mrf.mxu0
      %761 = vmatprep.mubr.f32.mxu0 0.0
      %762 = vmatmul.mubr.f32.gmra.mxu0 %v432
      %v763 = vpop.f32.mrf.mxu0
      %v764 = vadd.f32 0.0, %v763
      %v765 = vpop.f32.mrf.mxu0
      %766 = vmatprep.mubr.f32.mxu0 0.0
      %767 = vmatmul.mubr.f32.gmra.mxu0 %v435
      %v768 = vpop.f32.mrf.mxu0
      %v769 = vadd.f32 0.0, %v768
      %v770 = vpop.f32.mrf.mxu0
      %771 = vmatprep.mubr.f32.mxu0 0.0
      %772 = vmatmul.mubr.f32.gmra.mxu0 %v438
      %v773 = vpop.f32.mrf.mxu0
      %v774 = vadd.f32 0.0, %v773
      %v775 = vpop.f32.mrf.mxu0
      %776 = vmatprep.mubr.f32.mxu0 0.0
      %777 = vmatmul.mubr.f32.gmra.mxu0 %v441
      %v778 = vpop.f32.mrf.mxu0
      %v779 = vadd.f32 0.0, %v778
      %v780 = vpop.f32.mrf.mxu0
      %781 = vmatprep.mubr.f32.mxu0 0.0
      %782 = vmatmul.mubr.f32.gmra.mxu0 %v444
      %v783 = vpop.f32.mrf.mxu0
      %v784 = vadd.f32 0.0, %v783
      %v785 = vpop.f32.mrf.mxu0
      %786 = vmatprep.mubr.f32.mxu0 0.0
      %787 = vmatmul.mubr.f32.gmra.mxu0 %v447
      %v788 = vpop.f32.mrf.mxu0
      %v789 = vadd.f32 0.0, %v788
      %v790 = vpop.f32.mrf.mxu0
      %791 = vmatprep.mubr.f32.mxu0 0.0
      %792 = vmatmul.mubr.f32.gmra.mxu0 %v450
      %v793 = vpop.f32.mrf.mxu0
      %v794 = vadd.f32 0.0, %v793
      %v795 = vpop.f32.mrf.mxu0
      %796 = vmatprep.mubr.f32.mxu0 0.0
      %797 = vmatmul.mubr.f32.gmra.mxu0 %v453
      %v798 = vpop.f32.mrf.mxu0
      %v799 = vadd.f32 0.0, %v798
      %v800 = vpop.f32.mrf.mxu0
      %801 = vmatprep.mubr.f32.mxu0 0.0
      %802 = vmatmul.mubr.f32.gmra.mxu0 %v456
      %v803 = vpop.f32.mrf.mxu0
      %v804 = vadd.f32 0.0, %v803
      %v805 = vpop.f32.mrf.mxu0
      %806 = vmatprep.mubr.f32.mxu0 0.0
      %807 = vmatmul.mubr.f32.gmra.mxu0 %v459
      %v808 = vpop.f32.mrf.mxu0
      %v809 = vadd.f32 0.0, %v808
      %v810 = vpop.f32.mrf.mxu0
      %811 = vmatprep.mubr.f32.mxu0 0.0
      %812 = vmatmul.mubr.f32.gmra.mxu0 %v462
      %v813 = vpop.f32.mrf.mxu0
      %v814 = vadd.f32 0.0, %v813
      %v815 = vpop.f32.mrf.mxu0
      %816 = vmatprep.mubr.f32.mxu0 0.0
      %817 = vmatmul.mubr.f32.gmra.mxu0 %v465
      %v818 = vpop.f32.mrf.mxu0
      %v819 = vadd.f32 0.0, %v818
      %v820 = vpop.f32.mrf.mxu0
      %821 = vmatprep.mubr.f32.mxu0 0.0
      %822 = vmatmul.mubr.f32.gmra.mxu0 %v468
      %v823 = vpop.f32.mrf.mxu0
      %v824 = vadd.f32 0.0, %v823
      %v825 = vpop.f32.mrf.mxu0
      %826 = vmatprep.mubr.f32.mxu0 0.0
      %827 = vmatmul.mubr.f32.gmra.mxu0 %v471
      %v828 = vpop.f32.mrf.mxu0
      %v829 = vadd.f32 0.0, %v828
      %v830 = vpop.f32.mrf.mxu0
      %831 = vmatprep.mubr.f32.mxu0 0.0
      %832 = vmatmul.mubr.f32.gmra.mxu0 %v474
      %v833 = vpop.f32.mrf.mxu0
      %v834 = vadd.f32 0.0, %v833
      %v835 = vpop.f32.mrf.mxu0
      %836 = vmatprep.mubr.f32.mxu0 0.0
      %837 = vmatmul.mubr.f32.gmra.mxu0 %v477
      %v838 = vpop.f32.mrf.mxu0
      %v839 = vadd.f32 0.0, %v838
      %v840 = vpop.f32.mrf.mxu0
      %841 = vmatprep.mubr.f32.mxu0 0.0
      %842 = vmatmul.mubr.f32.gmra.mxu0 %v480
      %v843 = vpop.f32.mrf.mxu0
      %v844 = vadd.f32 0.0, %v843
      %v845 = vpop.f32.mrf.mxu0
      %846 = vmatprep.mubr.f32.mxu0 0.0
      %847 = vmatmul.mubr.f32.gmra.mxu0 %v483
      %v848 = vpop.f32.mrf.mxu0
      %v849 = vadd.f32 0.0, %v848
      %v850 = vpop.f32.mrf.mxu0
      %851 = vmatprep.mubr.f32.mxu0 0.0
      %852 = vmatmul.mubr.f32.gmra.mxu0 %v486
      %v853 = vpop.f32.mrf.mxu0
      %v854 = vadd.f32 0.0, %v853
      %v855 = vpop.f32.mrf.mxu0
      %856 = vmatprep.mubr.f32.mxu0 0.0
      %857 = vmatmul.mubr.f32.gmra.mxu0 %v489
      %v858 = vpop.f32.mrf.mxu0
      %v859 = vadd.f32 0.0, %v858
      %v860 = vpop.f32.mrf.mxu0
      %861 = vmatprep.mubr.f32.mxu0 0.0
      %862 = vmatmul.mubr.f32.gmra.mxu0 %v492
      %v863 = vpop.f32.mrf.mxu0
      %v864 = vadd.f32 0.0, %v863
      %v865 = vpop.f32.mrf.mxu0
      %866 = vmatprep.mubr.f32.mxu0 0.0
      %867 = vmatmul.mubr.f32.gmra.mxu0 %v495
      %v868 = vpop.f32.mrf.mxu0
      %v869 = vadd.f32 0.0, %v868
      %v870 = vpop.f32.mrf.mxu0
      %871 = vmatprep.mubr.f32.mxu0 0.0
      %872 = vmatmul.mubr.f32.gmra.mxu0 %v498
      %v873 = vpop.f32.mrf.mxu0
      %v874 = vadd.f32 0.0, %v873
      %v875 = vpop.f32.mrf.mxu0
      %876 = vmatprep.mubr.f32.mxu0 0.0
      %877 = vmatmul.mubr.f32.gmra.mxu0 %v501
      %v878 = vpop.f32.mrf.mxu0
      %v879 = vadd.f32 0.0, %v878
      %v880 = vpop.f32.mrf.mxu0
      %881 = vmatprep.mubr.f32.mxu0 0.0
      %882 = vmatmul.mubr.f32.gmra.mxu0 %v504
      %v883 = vpop.f32.mrf.mxu0
      %v884 = vadd.f32 0.0, %v883
      %v885 = vpop.f32.mrf.mxu0
      %886 = vmatprep.mubr.f32.mxu0 0.0
      %887 = vmatmul.mubr.f32.gmra.mxu0 %v507
      %v888 = vpop.f32.mrf.mxu0
      %v889 = vadd.f32 0.0, %v888
      %v890 = vpop.f32.mrf.mxu0
      %891 = vmatprep.mubr.f32.mxu0 0.0
      %892 = vmatmul.mubr.f32.gmra.mxu0 %v510
      %v893 = vpop.f32.mrf.mxu0
      %v894 = vadd.f32 0.0, %v893
      %v895 = vpop.f32.mrf.mxu0
      %896 = vdwg.mxu0
      %p897 = scmp.eq.s32.totalorder %s21, 0
      // Predicated region
      $region37: #{tpu_custom_call.1} parent=35 // pred_check
        %p898 = pneg %p897
      $region38: #{tpu_custom_call.1} parent=35 // pred_check_branch
        %900 = sbr.rel (%p898) target = $region40
      $region39: #{tpu_custom_call.1} parent=35 // pred_region
        %vm901 = vcmask 64512
        %902 = vst.msk [vmem:[%s245] sm:$0xff] %vm901, %v579
        %903 = vst.msk [vmem:[%s245 + $0x8] sm:$0xff] %vm901, %v584
        %904 = vst.msk [vmem:[%s245 + $0x10] sm:$0xff] %vm901, %v589
        %905 = vst.msk [vmem:[%s245 + $0x18] sm:$0xff] %vm901, %v594
        %906 = vst.msk [vmem:[%s245 + $0x20] sm:$0xff] %vm901, %v599
        %907 = vst.msk [vmem:[%s245 + $0x28] sm:$0xff] %vm901, %v604
        %908 = vst.msk [vmem:[%s245 + $0x30] sm:$0xff] %vm901, %v609
        %909 = vst.msk [vmem:[%s245 + $0x38] sm:$0xff] %vm901, %v614
        %910 = vst.msk [vmem:[%s245 + $0x40] sm:$0xff] %vm901, %v619
        %911 = vst.msk [vmem:[%s245 + $0x48] sm:$0xff] %vm901, %v624
        %912 = vst.msk [vmem:[%s245 + $0x50] sm:$0xff] %vm901, %v629
        %913 = vst.msk [vmem:[%s245 + $0x58] sm:$0xff] %vm901, %v634
        %914 = vst.msk [vmem:[%s245 + $0x60] sm:$0xff] %vm901, %v639
        %915 = vst.msk [vmem:[%s245 + $0x68] sm:$0xff] %vm901, %v644
        %916 = vst.msk [vmem:[%s245 + $0x70] sm:$0xff] %vm901, %v649
        %917 = vst.msk [vmem:[%s245 + $0x78] sm:$0xff] %vm901, %v654
        %918 = vst.msk [vmem:[%s245 + $0x80] sm:$0xff] %vm901, %v659
        %919 = vst.msk [vmem:[%s245 + $0x88] sm:$0xff] %vm901, %v664
        %920 = vst.msk [vmem:[%s245 + $0x90] sm:$0xff] %vm901, %v669
        %921 = vst.msk [vmem:[%s245 + $0x98] sm:$0xff] %vm901, %v674
        %922 = vst.msk [vmem:[%s245 + $0xa0] sm:$0xff] %vm901, %v679
        %923 = vst.msk [vmem:[%s245 + $0xa8] sm:$0xff] %vm901, %v684
        %924 = vst.msk [vmem:[%s245 + $0xb0] sm:$0xff] %vm901, %v689
        %925 = vst.msk [vmem:[%s245 + $0xb8] sm:$0xff] %vm901, %v694
        %926 = vst.msk [vmem:[%s245 + $0xc0] sm:$0xff] %vm901, %v699
        %927 = vst.msk [vmem:[%s245 + $0xc8] sm:$0xff] %vm901, %v704
        %928 = vst.msk [vmem:[%s245 + $0xd0] sm:$0xff] %vm901, %v709
        %929 = vst.msk [vmem:[%s245 + $0xd8] sm:$0xff] %vm901, %v714
        %930 = vst.msk [vmem:[%s245 + $0xe0] sm:$0xff] %vm901, %v719
        %931 = vst.msk [vmem:[%s245 + $0xe8] sm:$0xff] %vm901, %v724
        %932 = vst.msk [vmem:[%s245 + $0xf0] sm:$0xff] %vm901, %v729
        %933 = vst.msk [vmem:[%s245 + $0xf8] sm:$0xff] %vm901, %v734
        %934 = vst.msk [vmem:[%s245 + $0x100] sm:$0xff] %vm901, %v739
        %935 = vst.msk [vmem:[%s245 + $0x108] sm:$0xff] %vm901, %v744
        %936 = vst.msk [vmem:[%s245 + $0x110] sm:$0xff] %vm901, %v749
        %937 = vst.msk [vmem:[%s245 + $0x118] sm:$0xff] %vm901, %v754
        %938 = vst.msk [vmem:[%s245 + $0x120] sm:$0xff] %vm901, %v759
        %939 = vst.msk [vmem:[%s245 + $0x128] sm:$0xff] %vm901, %v764
        %940 = vst.msk [vmem:[%s245 + $0x130] sm:$0xff] %vm901, %v769
        %941 = vst.msk [vmem:[%s245 + $0x138] sm:$0xff] %vm901, %v774
        %942 = vst.msk [vmem:[%s245 + $0x140] sm:$0xff] %vm901, %v779
        %943 = vst.msk [vmem:[%s245 + $0x148] sm:$0xff] %vm901, %v784
        %944 = vst.msk [vmem:[%s245 + $0x150] sm:$0xff] %vm901, %v789
        %945 = vst.msk [vmem:[%s245 + $0x158] sm:$0xff] %vm901, %v794
        %946 = vst.msk [vmem:[%s245 + $0x160] sm:$0xff] %vm901, %v799
        %947 = vst.msk [vmem:[%s245 + $0x168] sm:$0xff] %vm901, %v804
        %948 = vst.msk [vmem:[%s245 + $0x170] sm:$0xff] %vm901, %v809
        %949 = vst.msk [vmem:[%s245 + $0x178] sm:$0xff] %vm901, %v814
        %950 = vst.msk [vmem:[%s245 + $0x180] sm:$0xff] %vm901, %v819
        %951 = vst.msk [vmem:[%s245 + $0x188] sm:$0xff] %vm901, %v824
        %952 = vst.msk [vmem:[%s245 + $0x190] sm:$0xff] %vm901, %v829
        %953 = vst.msk [vmem:[%s245 + $0x198] sm:$0xff] %vm901, %v834
        %954 = vst.msk [vmem:[%s245 + $0x1a0] sm:$0xff] %vm901, %v839
        %955 = vst.msk [vmem:[%s245 + $0x1a8] sm:$0xff] %vm901, %v844
        %956 = vst.msk [vmem:[%s245 + $0x1b0] sm:$0xff] %vm901, %v849
        %957 = vst.msk [vmem:[%s245 + $0x1b8] sm:$0xff] %vm901, %v854
        %958 = vst.msk [vmem:[%s245 + $0x1c0] sm:$0xff] %vm901, %v859
        %959 = vst.msk [vmem:[%s245 + $0x1c8] sm:$0xff] %vm901, %v864
        %960 = vst.msk [vmem:[%s245 + $0x1d0] sm:$0xff] %vm901, %v869
        %961 = vst.msk [vmem:[%s245 + $0x1d8] sm:$0xff] %vm901, %v874
        %962 = vst.msk [vmem:[%s245 + $0x1e0] sm:$0xff] %vm901, %v879
        %963 = vst.msk [vmem:[%s245 + $0x1e8] sm:$0xff] %vm901, %v884
        %964 = vst.msk [vmem:[%s245 + $0x1f0] sm:$0xff] %vm901, %v889
        %965 = vst.msk [vmem:[%s245 + $0x1f8] sm:$0xff] %vm901, %v894
      $region40: #{tpu_custom_call.1} parent=35 // pred_fallthru
        _
      %p966 = scmp.gt.s32.totalorder %s21, 0
      // Predicated region
      $region41: #{tpu_custom_call.1} parent=35 // pred_check
        %p967 = pneg %p966
      $region42: #{tpu_custom_call.1} parent=35 // pred_check_branch
        %969 = sbr.rel (%p967) target = $region44
      $region43: #{tpu_custom_call.1} parent=35 // pred_region
        %v970 = vld [vmem:[%s245] sm:$0xff]
        %v971 = vld [vmem:[%s245 + $0x8] sm:$0xff]
        %v972 = vld [vmem:[%s245 + $0x10] sm:$0xff]
        %v973 = vld [vmem:[%s245 + $0x18] sm:$0xff]
        %v974 = vld [vmem:[%s245 + $0x20] sm:$0xff]
        %v975 = vld [vmem:[%s245 + $0x28] sm:$0xff]
        %v976 = vld [vmem:[%s245 + $0x30] sm:$0xff]
        %v977 = vld [vmem:[%s245 + $0x38] sm:$0xff]
        %v978 = vld [vmem:[%s245 + $0x40] sm:$0xff]
        %v979 = vld [vmem:[%s245 + $0x48] sm:$0xff]
        %v980 = vld [vmem:[%s245 + $0x50] sm:$0xff]
        %v981 = vld [vmem:[%s245 + $0x58] sm:$0xff]
        %v982 = vld [vmem:[%s245 + $0x60] sm:$0xff]
        %v983 = vld [vmem:[%s245 + $0x68] sm:$0xff]
        %v984 = vld [vmem:[%s245 + $0x70] sm:$0xff]
        %v985 = vld [vmem:[%s245 + $0x78] sm:$0xff]
        %v986 = vld [vmem:[%s245 + $0x80] sm:$0xff]
        %v987 = vld [vmem:[%s245 + $0x88] sm:$0xff]
        %v988 = vld [vmem:[%s245 + $0x90] sm:$0xff]
        %v989 = vld [vmem:[%s245 + $0x98] sm:$0xff]
        %v990 = vld [vmem:[%s245 + $0xa0] sm:$0xff]
        %v991 = vld [vmem:[%s245 + $0xa8] sm:$0xff]
        %v992 = vld [vmem:[%s245 + $0xb0] sm:$0xff]
        %v993 = vld [vmem:[%s245 + $0xb8] sm:$0xff]
        %v994 = vld [vmem:[%s245 + $0xc0] sm:$0xff]
        %v995 = vld [vmem:[%s245 + $0xc8] sm:$0xff]
        %v996 = vld [vmem:[%s245 + $0xd0] sm:$0xff]
        %v997 = vld [vmem:[%s245 + $0xd8] sm:$0xff]
        %v998 = vld [vmem:[%s245 + $0xe0] sm:$0xff]
        %v999 = vld [vmem:[%s245 + $0xe8] sm:$0xff]
        %v1000 = vld [vmem:[%s245 + $0xf0] sm:$0xff]
        %v1001 = vld [vmem:[%s245 + $0xf8] sm:$0xff]
        %v1002 = vld [vmem:[%s245 + $0x100] sm:$0xff]
        %v1003 = vld [vmem:[%s245 + $0x108] sm:$0xff]
        %v1004 = vld [vmem:[%s245 + $0x110] sm:$0xff]
        %v1005 = vld [vmem:[%s245 + $0x118] sm:$0xff]
        %v1006 = vld [vmem:[%s245 + $0x120] sm:$0xff]
        %v1007 = vld [vmem:[%s245 + $0x128] sm:$0xff]
        %v1008 = vld [vmem:[%s245 + $0x130] sm:$0xff]
        %v1009 = vld [vmem:[%s245 + $0x138] sm:$0xff]
        %v1010 = vld [vmem:[%s245 + $0x140] sm:$0xff]
        %v1011 = vld [vmem:[%s245 + $0x148] sm:$0xff]
        %v1012 = vld [vmem:[%s245 + $0x150] sm:$0xff]
        %v1013 = vld [vmem:[%s245 + $0x158] sm:$0xff]
        %v1014 = vld [vmem:[%s245 + $0x160] sm:$0xff]
        %v1015 = vld [vmem:[%s245 + $0x168] sm:$0xff]
        %v1016 = vld [vmem:[%s245 + $0x170] sm:$0xff]
        %v1017 = vld [vmem:[%s245 + $0x178] sm:$0xff]
        %v1018 = vld [vmem:[%s245 + $0x180] sm:$0xff]
        %v1019 = vld [vmem:[%s245 + $0x188] sm:$0xff]
        %v1020 = vld [vmem:[%s245 + $0x190] sm:$0xff]
        %v1021 = vld [vmem:[%s245 + $0x198] sm:$0xff]
        %v1022 = vld [vmem:[%s245 + $0x1a0] sm:$0xff]
        %v1023 = vld [vmem:[%s245 + $0x1a8] sm:$0xff]
        %v1024 = vld [vmem:[%s245 + $0x1b0] sm:$0xff]
        %v1025 = vld [vmem:[%s245 + $0x1b8] sm:$0xff]
        %v1026 = vld [vmem:[%s245 + $0x1c0] sm:$0xff]
        %v1027 = vld [vmem:[%s245 + $0x1c8] sm:$0xff]
        %v1028 = vld [vmem:[%s245 + $0x1d0] sm:$0xff]
        %v1029 = vld [vmem:[%s245 + $0x1d8] sm:$0xff]
        %v1030 = vld [vmem:[%s245 + $0x1e0] sm:$0xff]
        %v1031 = vld [vmem:[%s245 + $0x1e8] sm:$0xff]
        %v1032 = vld [vmem:[%s245 + $0x1f0] sm:$0xff]
        %v1033 = vld [vmem:[%s245 + $0x1f8] sm:$0xff]
        %v1034 = vadd.f32 %v970, %v579
        %v1035 = vadd.f32 %v971, %v584
        %v1036 = vadd.f32 %v972, %v589
        %v1037 = vadd.f32 %v973, %v594
        %v1038 = vadd.f32 %v974, %v599
        %v1039 = vadd.f32 %v975, %v604
        %v1040 = vadd.f32 %v976, %v609
        %v1041 = vadd.f32 %v977, %v614
        %v1042 = vadd.f32 %v978, %v619
        %v1043 = vadd.f32 %v979, %v624
        %v1044 = vadd.f32 %v980, %v629
        %v1045 = vadd.f32 %v981, %v634
        %v1046 = vadd.f32 %v982, %v639
        %v1047 = vadd.f32 %v983, %v644
        %v1048 = vadd.f32 %v984, %v649
        %v1049 = vadd.f32 %v985, %v654
        %v1050 = vadd.f32 %v986, %v659
        %v1051 = vadd.f32 %v987, %v664
        %v1052 = vadd.f32 %v988, %v669
        %v1053 = vadd.f32 %v989, %v674
        %v1054 = vadd.f32 %v990, %v679
        %v1055 = vadd.f32 %v991, %v684
        %v1056 = vadd.f32 %v992, %v689
        %v1057 = vadd.f32 %v993, %v694
        %v1058 = vadd.f32 %v994, %v699
        %v1059 = vadd.f32 %v995, %v704
        %v1060 = vadd.f32 %v996, %v709
        %v1061 = vadd.f32 %v997, %v714
        %v1062 = vadd.f32 %v998, %v719
        %v1063 = vadd.f32 %v999, %v724
        %v1064 = vadd.f32 %v1000, %v729
        %v1065 = vadd.f32 %v1001, %v734
        %v1066 = vadd.f32 %v1002, %v739
        %v1067 = vadd.f32 %v1003, %v744
        %v1068 = vadd.f32 %v1004, %v749
        %v1069 = vadd.f32 %v1005, %v754
        %v1070 = vadd.f32 %v1006, %v759
        %v1071 = vadd.f32 %v1007, %v764
        %v1072 = vadd.f32 %v1008, %v769
        %v1073 = vadd.f32 %v1009, %v774
        %v1074 = vadd.f32 %v1010, %v779
        %v1075 = vadd.f32 %v1011, %v784
        %v1076 = vadd.f32 %v1012, %v789
        %v1077 = vadd.f32 %v1013, %v794
        %v1078 = vadd.f32 %v1014, %v799
        %v1079 = vadd.f32 %v1015, %v804
        %v1080 = vadd.f32 %v1016, %v809
        %v1081 = vadd.f32 %v1017, %v814
        %v1082 = vadd.f32 %v1018, %v819
        %v1083 = vadd.f32 %v1019, %v824
        %v1084 = vadd.f32 %v1020, %v829
        %v1085 = vadd.f32 %v1021, %v834
        %v1086 = vadd.f32 %v1022, %v839
        %v1087 = vadd.f32 %v1023, %v844
        %v1088 = vadd.f32 %v1024, %v849
        %v1089 = vadd.f32 %v1025, %v854
        %v1090 = vadd.f32 %v1026, %v859
        %v1091 = vadd.f32 %v1027, %v864
        %v1092 = vadd.f32 %v1028, %v869
        %v1093 = vadd.f32 %v1029, %v874
        %v1094 = vadd.f32 %v1030, %v879
        %v1095 = vadd.f32 %v1031, %v884
        %v1096 = vadd.f32 %v1032, %v889
        %v1097 = vadd.f32 %v1033, %v894
        %vm1098 = vcmask 64512
        %1099 = vst.msk [vmem:[%s245] sm:$0xff] %vm1098, %v1034
        %1100 = vst.msk [vmem:[%s245 + $0x8] sm:$0xff] %vm1098, %v1035
        %1101 = vst.msk [vmem:[%s245 + $0x10] sm:$0xff] %vm1098, %v1036
        %1102 = vst.msk [vmem:[%s245 + $0x18] sm:$0xff] %vm1098, %v1037
        %1103 = vst.msk [vmem:[%s245 + $0x20] sm:$0xff] %vm1098, %v1038
        %1104 = vst.msk [vmem:[%s245 + $0x28] sm:$0xff] %vm1098, %v1039
        %1105 = vst.msk [vmem:[%s245 + $0x30] sm:$0xff] %vm1098, %v1040
        %1106 = vst.msk [vmem:[%s245 + $0x38] sm:$0xff] %vm1098, %v1041
        %1107 = vst.msk [vmem:[%s245 + $0x40] sm:$0xff] %vm1098, %v1042
        %1108 = vst.msk [vmem:[%s245 + $0x48] sm:$0xff] %vm1098, %v1043
        %1109 = vst.msk [vmem:[%s245 + $0x50] sm:$0xff] %vm1098, %v1044
        %1110 = vst.msk [vmem:[%s245 + $0x58] sm:$0xff] %vm1098, %v1045
        %1111 = vst.msk [vmem:[%s245 + $0x60] sm:$0xff] %vm1098, %v1046
        %1112 = vst.msk [vmem:[%s245 + $0x68] sm:$0xff] %vm1098, %v1047
        %1113 = vst.msk [vmem:[%s245 + $0x70] sm:$0xff] %vm1098, %v1048
        %1114 = vst.msk [vmem:[%s245 + $0x78] sm:$0xff] %vm1098, %v1049
        %1115 = vst.msk [vmem:[%s245 + $0x80] sm:$0xff] %vm1098, %v1050
        %1116 = vst.msk [vmem:[%s245 + $0x88] sm:$0xff] %vm1098, %v1051
        %1117 = vst.msk [vmem:[%s245 + $0x90] sm:$0xff] %vm1098, %v1052
        %1118 = vst.msk [vmem:[%s245 + $0x98] sm:$0xff] %vm1098, %v1053
        %1119 = vst.msk [vmem:[%s245 + $0xa0] sm:$0xff] %vm1098, %v1054
        %1120 = vst.msk [vmem:[%s245 + $0xa8] sm:$0xff] %vm1098, %v1055
        %1121 = vst.msk [vmem:[%s245 + $0xb0] sm:$0xff] %vm1098, %v1056
        %1122 = vst.msk [vmem:[%s245 + $0xb8] sm:$0xff] %vm1098, %v1057
        %1123 = vst.msk [vmem:[%s245 + $0xc0] sm:$0xff] %vm1098, %v1058
        %1124 = vst.msk [vmem:[%s245 + $0xc8] sm:$0xff] %vm1098, %v1059
        %1125 = vst.msk [vmem:[%s245 + $0xd0] sm:$0xff] %vm1098, %v1060
        %1126 = vst.msk [vmem:[%s245 + $0xd8] sm:$0xff] %vm1098, %v1061
        %1127 = vst.msk [vmem:[%s245 + $0xe0] sm:$0xff] %vm1098, %v1062
        %1128 = vst.msk [vmem:[%s245 + $0xe8] sm:$0xff] %vm1098, %v1063
        %1129 = vst.msk [vmem:[%s245 + $0xf0] sm:$0xff] %vm1098, %v1064
        %1130 = vst.msk [vmem:[%s245 + $0xf8] sm:$0xff] %vm1098, %v1065
        %1131 = vst.msk [vmem:[%s245 + $0x100] sm:$0xff] %vm1098, %v1066
        %1132 = vst.msk [vmem:[%s245 + $0x108] sm:$0xff] %vm1098, %v1067
        %1133 = vst.msk [vmem:[%s245 + $0x110] sm:$0xff] %vm1098, %v1068
        %1134 = vst.msk [vmem:[%s245 + $0x118] sm:$0xff] %vm1098, %v1069
        %1135 = vst.msk [vmem:[%s245 + $0x120] sm:$0xff] %vm1098, %v1070
        %1136 = vst.msk [vmem:[%s245 + $0x128] sm:$0xff] %vm1098, %v1071
        %1137 = vst.msk [vmem:[%s245 + $0x130] sm:$0xff] %vm1098, %v1072
        %1138 = vst.msk [vmem:[%s245 + $0x138] sm:$0xff] %vm1098, %v1073
        %1139 = vst.msk [vmem:[%s245 + $0x140] sm:$0xff] %vm1098, %v1074
        %1140 = vst.msk [vmem:[%s245 + $0x148] sm:$0xff] %vm1098, %v1075
        %1141 = vst.msk [vmem:[%s245 + $0x150] sm:$0xff] %vm1098, %v1076
        %1142 = vst.msk [vmem:[%s245 + $0x158] sm:$0xff] %vm1098, %v1077
        %1143 = vst.msk [vmem:[%s245 + $0x160] sm:$0xff] %vm1098, %v1078
        %1144 = vst.msk [vmem:[%s245 + $0x168] sm:$0xff] %vm1098, %v1079
        %1145 = vst.msk [vmem:[%s245 + $0x170] sm:$0xff] %vm1098, %v1080
        %1146 = vst.msk [vmem:[%s245 + $0x178] sm:$0xff] %vm1098, %v1081
        %1147 = vst.msk [vmem:[%s245 + $0x180] sm:$0xff] %vm1098, %v1082
        %1148 = vst.msk [vmem:[%s245 + $0x188] sm:$0xff] %vm1098, %v1083
        %1149 = vst.msk [vmem:[%s245 + $0x190] sm:$0xff] %vm1098, %v1084
        %1150 = vst.msk [vmem:[%s245 + $0x198] sm:$0xff] %vm1098, %v1085
        %1151 = vst.msk [vmem:[%s245 + $0x1a0] sm:$0xff] %vm1098, %v1086
        %1152 = vst.msk [vmem:[%s245 + $0x1a8] sm:$0xff] %vm1098, %v1087
        %1153 = vst.msk [vmem:[%s245 + $0x1b0] sm:$0xff] %vm1098, %v1088
        %1154 = vst.msk [vmem:[%s245 + $0x1b8] sm:$0xff] %vm1098, %v1089
        %1155 = vst.msk [vmem:[%s245 + $0x1c0] sm:$0xff] %vm1098, %v1090
        %1156 = vst.msk [vmem:[%s245 + $0x1c8] sm:$0xff] %vm1098, %v1091
        %1157 = vst.msk [vmem:[%s245 + $0x1d0] sm:$0xff] %vm1098, %v1092
        %1158 = vst.msk [vmem:[%s245 + $0x1d8] sm:$0xff] %vm1098, %v1093
        %1159 = vst.msk [vmem:[%s245 + $0x1e0] sm:$0xff] %vm1098, %v1094
        %1160 = vst.msk [vmem:[%s245 + $0x1e8] sm:$0xff] %vm1098, %v1095
        %1161 = vst.msk [vmem:[%s245 + $0x1f0] sm:$0xff] %vm1098, %v1096
        %1162 = vst.msk [vmem:[%s245 + $0x1f8] sm:$0xff] %vm1098, %v1097
      $region44: #{tpu_custom_call.1} parent=35 // pred_fallthru
        _
      // Predicated region
      $region45: #{tpu_custom_call.1} parent=35 // pred_check
        %p1163 = pneg %p897
      $region46: #{tpu_custom_call.1} parent=35 // pred_check_branch
        %1165 = sbr.rel (%p1163) target = $region48
      $region47: #{tpu_custom_call.1} parent=35 // pred_region
        %s1166 = sld [smem:[#allocation2]]
        %v1167 = vld [vmem:[%s245] sm:$0xff]
        %v1168 = vld [vmem:[%s245 + $0x8] sm:$0xff]
        %v1169 = vld [vmem:[%s245 + $0x10] sm:$0xff]
        %v1170 = vld [vmem:[%s245 + $0x18] sm:$0xff]
        %v1171 = vld [vmem:[%s245 + $0x20] sm:$0xff]
        %v1172 = vld [vmem:[%s245 + $0x28] sm:$0xff]
        %v1173 = vld [vmem:[%s245 + $0x30] sm:$0xff]
        %v1174 = vld [vmem:[%s245 + $0x38] sm:$0xff]
        %v1175 = vld [vmem:[%s245 + $0x40] sm:$0xff]
        %v1176 = vld [vmem:[%s245 + $0x48] sm:$0xff]
        %v1177 = vld [vmem:[%s245 + $0x50] sm:$0xff]
        %v1178 = vld [vmem:[%s245 + $0x58] sm:$0xff]
        %v1179 = vld [vmem:[%s245 + $0x60] sm:$0xff]
        %v1180 = vld [vmem:[%s245 + $0x68] sm:$0xff]
        %v1181 = vld [vmem:[%s245 + $0x70] sm:$0xff]
        %v1182 = vld [vmem:[%s245 + $0x78] sm:$0xff]
        %v1183 = vld [vmem:[%s245 + $0x80] sm:$0xff]
        %v1184 = vld [vmem:[%s245 + $0x88] sm:$0xff]
        %v1185 = vld [vmem:[%s245 + $0x90] sm:$0xff]
        %v1186 = vld [vmem:[%s245 + $0x98] sm:$0xff]
        %v1187 = vld [vmem:[%s245 + $0xa0] sm:$0xff]
        %v1188 = vld [vmem:[%s245 + $0xa8] sm:$0xff]
        %v1189 = vld [vmem:[%s245 + $0xb0] sm:$0xff]
        %v1190 = vld [vmem:[%s245 + $0xb8] sm:$0xff]
        %v1191 = vld [vmem:[%s245 + $0xc0] sm:$0xff]
        %v1192 = vld [vmem:[%s245 + $0xc8] sm:$0xff]
        %v1193 = vld [vmem:[%s245 + $0xd0] sm:$0xff]
        %v1194 = vld [vmem:[%s245 + $0xd8] sm:$0xff]
        %v1195 = vld [vmem:[%s245 + $0xe0] sm:$0xff]
        %v1196 = vld [vmem:[%s245 + $0xe8] sm:$0xff]
        %v1197 = vld [vmem:[%s245 + $0xf0] sm:$0xff]
        %v1198 = vld [vmem:[%s245 + $0xf8] sm:$0xff]
        %v1199 = vld [vmem:[%s245 + $0x100] sm:$0xff]
        %v1200 = vld [vmem:[%s245 + $0x108] sm:$0xff]
        %v1201 = vld [vmem:[%s245 + $0x110] sm:$0xff]
        %v1202 = vld [vmem:[%s245 + $0x118] sm:$0xff]
        %v1203 = vld [vmem:[%s245 + $0x120] sm:$0xff]
        %v1204 = vld [vmem:[%s245 + $0x128] sm:$0xff]
        %v1205 = vld [vmem:[%s245 + $0x130] sm:$0xff]
        %v1206 = vld [vmem:[%s245 + $0x138] sm:$0xff]
        %v1207 = vld [vmem:[%s245 + $0x140] sm:$0xff]
        %v1208 = vld [vmem:[%s245 + $0x148] sm:$0xff]
        %v1209 = vld [vmem:[%s245 + $0x150] sm:$0xff]
        %v1210 = vld [vmem:[%s245 + $0x158] sm:$0xff]
        %v1211 = vld [vmem:[%s245 + $0x160] sm:$0xff]
        %v1212 = vld [vmem:[%s245 + $0x168] sm:$0xff]
        %v1213 = vld [vmem:[%s245 + $0x170] sm:$0xff]
        %v1214 = vld [vmem:[%s245 + $0x178] sm:$0xff]
        %v1215 = vld [vmem:[%s245 + $0x180] sm:$0xff]
        %v1216 = vld [vmem:[%s245 + $0x188] sm:$0xff]
        %v1217 = vld [vmem:[%s245 + $0x190] sm:$0xff]
        %v1218 = vld [vmem:[%s245 + $0x198] sm:$0xff]
        %v1219 = vld [vmem:[%s245 + $0x1a0] sm:$0xff]
        %v1220 = vld [vmem:[%s245 + $0x1a8] sm:$0xff]
        %v1221 = vld [vmem:[%s245 + $0x1b0] sm:$0xff]
        %v1222 = vld [vmem:[%s245 + $0x1b8] sm:$0xff]
        %v1223 = vld [vmem:[%s245 + $0x1c0] sm:$0xff]
        %v1224 = vld [vmem:[%s245 + $0x1c8] sm:$0xff]
        %v1225 = vld [vmem:[%s245 + $0x1d0] sm:$0xff]
        %v1226 = vld [vmem:[%s245 + $0x1d8] sm:$0xff]
        %v1227 = vld [vmem:[%s245 + $0x1e0] sm:$0xff]
        %v1228 = vld [vmem:[%s245 + $0x1e8] sm:$0xff]
        %v1229 = vld [vmem:[%s245 + $0x1f0] sm:$0xff]
        %v1230 = vld [vmem:[%s245 + $0x1f8] sm:$0xff]
        %v1231 = vld [vmem:[%s3] sm:$0x1]
        %v1233 = vlaneseq
        %v1234 = vshrl.u32 %v1233, 7
        %v1235 = vsub.s32 0, %v1234
        %v1236 = vrot.slane %v1231, %v1235
        %v1238 = vadd.f32 %v1167, %v1236
        %v1239 = vadd.f32 %v1168, %v1236
        %v1240 = vadd.f32 %v1169, %v1236
        %v1241 = vadd.f32 %v1170, %v1236
        %v1242 = vadd.f32 %v1171, %v1236
        %v1243 = vadd.f32 %v1172, %v1236
        %v1244 = vadd.f32 %v1173, %v1236
        %v1245 = vadd.f32 %v1174, %v1236
        %v1246 = vadd.f32 %v1175, %v1236
        %v1247 = vadd.f32 %v1176, %v1236
        %v1248 = vadd.f32 %v1177, %v1236
        %v1249 = vadd.f32 %v1178, %v1236
        %v1250 = vadd.f32 %v1179, %v1236
        %v1251 = vadd.f32 %v1180, %v1236
        %v1252 = vadd.f32 %v1181, %v1236
        %v1253 = vadd.f32 %v1182, %v1236
        %v1254 = vadd.f32 %v1183, %v1236
        %v1255 = vadd.f32 %v1184, %v1236
        %v1256 = vadd.f32 %v1185, %v1236
        %v1257 = vadd.f32 %v1186, %v1236
        %v1258 = vadd.f32 %v1187, %v1236
        %v1259 = vadd.f32 %v1188, %v1236
        %v1260 = vadd.f32 %v1189, %v1236
        %v1261 = vadd.f32 %v1190, %v1236
        %v1262 = vadd.f32 %v1191, %v1236
        %v1263 = vadd.f32 %v1192, %v1236
        %v1264 = vadd.f32 %v1193, %v1236
        %v1265 = vadd.f32 %v1194, %v1236
        %v1266 = vadd.f32 %v1195, %v1236
        %v1267 = vadd.f32 %v1196, %v1236
        %v1268 = vadd.f32 %v1197, %v1236
        %v1269 = vadd.f32 %v1198, %v1236
        %v1270 = vadd.f32 %v1199, %v1236
        %v1271 = vadd.f32 %v1200, %v1236
        %v1272 = vadd.f32 %v1201, %v1236
        %v1273 = vadd.f32 %v1202, %v1236
        %v1274 = vadd.f32 %v1203, %v1236
        %v1275 = vadd.f32 %v1204, %v1236
        %v1276 = vadd.f32 %v1205, %v1236
        %v1277 = vadd.f32 %v1206, %v1236
        %v1278 = vadd.f32 %v1207, %v1236
        %v1279 = vadd.f32 %v1208, %v1236
        %v1280 = vadd.f32 %v1209, %v1236
        %v1281 = vadd.f32 %v1210, %v1236
        %v1282 = vadd.f32 %v1211, %v1236
        %v1283 = vadd.f32 %v1212, %v1236
        %v1284 = vadd.f32 %v1213, %v1236
        %v1285 = vadd.f32 %v1214, %v1236
        %v1286 = vadd.f32 %v1215, %v1236
        %v1287 = vadd.f32 %v1216, %v1236
        %v1288 = vadd.f32 %v1217, %v1236
        %v1289 = vadd.f32 %v1218, %v1236
        %v1290 = vadd.f32 %v1219, %v1236
        %v1291 = vadd.f32 %v1220, %v1236
        %v1292 = vadd.f32 %v1221, %v1236
        %v1293 = vadd.f32 %v1222, %v1236
        %v1294 = vadd.f32 %v1223, %v1236
        %v1295 = vadd.f32 %v1224, %v1236
        %v1296 = vadd.f32 %v1225, %v1236
        %v1297 = vadd.f32 %v1226, %v1236
        %v1298 = vadd.f32 %v1227, %v1236
        %v1299 = vadd.f32 %v1228, %v1236
        %v1300 = vadd.f32 %v1229, %v1236
        %v1301 = vadd.f32 %v1230, %v1236
        %v1302 = vstv %s1166
        %v1303 = vmul.f32 %v1302, %v1238
        %v1304 = vmul.f32 %v1302, %v1239
        %v1305 = vmul.f32 %v1302, %v1240
        %v1306 = vmul.f32 %v1302, %v1241
        %v1307 = vmul.f32 %v1302, %v1242
        %v1308 = vmul.f32 %v1302, %v1243
        %v1309 = vmul.f32 %v1302, %v1244
        %v1310 = vmul.f32 %v1302, %v1245
        %v1311 = vmul.f32 %v1302, %v1246
        %v1312 = vmul.f32 %v1302, %v1247
        %v1313 = vmul.f32 %v1302, %v1248
        %v1314 = vmul.f32 %v1302, %v1249
        %v1315 = vmul.f32 %v1302, %v1250
        %v1316 = vmul.f32 %v1302, %v1251
        %v1317 = vmul.f32 %v1302, %v1252
        %v1318 = vmul.f32 %v1302, %v1253
        %v1319 = vmul.f32 %v1302, %v1254
        %v1320 = vmul.f32 %v1302, %v1255
        %v1321 = vmul.f32 %v1302, %v1256
        %v1322 = vmul.f32 %v1302, %v1257
        %v1323 = vmul.f32 %v1302, %v1258
        %v1324 = vmul.f32 %v1302, %v1259
        %v1325 = vmul.f32 %v1302, %v1260
        %v1326 = vmul.f32 %v1302, %v1261
        %v1327 = vmul.f32 %v1302, %v1262
        %v1328 = vmul.f32 %v1302, %v1263
        %v1329 = vmul.f32 %v1302, %v1264
        %v1330 = vmul.f32 %v1302, %v1265
        %v1331 = vmul.f32 %v1302, %v1266
        %v1332 = vmul.f32 %v1302, %v1267
        %v1333 = vmul.f32 %v1302, %v1268
        %v1334 = vmul.f32 %v1302, %v1269
        %v1335 = vmul.f32 %v1302, %v1270
        %v1336 = vmul.f32 %v1302, %v1271
        %v1337 = vmul.f32 %v1302, %v1272
        %v1338 = vmul.f32 %v1302, %v1273
        %v1339 = vmul.f32 %v1302, %v1274
        %v1340 = vmul.f32 %v1302, %v1275
        %v1341 = vmul.f32 %v1302, %v1276
        %v1342 = vmul.f32 %v1302, %v1277
        %v1343 = vmul.f32 %v1302, %v1278
        %v1344 = vmul.f32 %v1302, %v1279
        %v1345 = vmul.f32 %v1302, %v1280
        %v1346 = vmul.f32 %v1302, %v1281
        %v1347 = vmul.f32 %v1302, %v1282
        %v1348 = vmul.f32 %v1302, %v1283
        %v1349 = vmul.f32 %v1302, %v1284
        %v1350 = vmul.f32 %v1302, %v1285
        %v1351 = vmul.f32 %v1302, %v1286
        %v1352 = vmul.f32 %v1302, %v1287
        %v1353 = vmul.f32 %v1302, %v1288
        %v1354 = vmul.f32 %v1302, %v1289
        %v1355 = vmul.f32 %v1302, %v1290
        %v1356 = vmul.f32 %v1302, %v1291
        %v1357 = vmul.f32 %v1302, %v1292
        %v1358 = vmul.f32 %v1302, %v1293
        %v1359 = vmul.f32 %v1302, %v1294
        %v1360 = vmul.f32 %v1302, %v1295
        %v1361 = vmul.f32 %v1302, %v1296
        %v1362 = vmul.f32 %v1302, %v1297
        %v1363 = vmul.f32 %v1302, %v1298
        %v1364 = vmul.f32 %v1302, %v1299
        %v1365 = vmul.f32 %v1302, %v1300
        %v1366 = vmul.f32 %v1302, %v1301
        %vm1367 = vcmask 64512
        %1368 = vst.msk [vmem:[%s245] sm:$0xff] %vm1367, %v1303
        %1369 = vst.msk [vmem:[%s245 + $0x8] sm:$0xff] %vm1367, %v1304
        %1370 = vst.msk [vmem:[%s245 + $0x10] sm:$0xff] %vm1367, %v1305
        %1371 = vst.msk [vmem:[%s245 + $0x18] sm:$0xff] %vm1367, %v1306
        %1372 = vst.msk [vmem:[%s245 + $0x20] sm:$0xff] %vm1367, %v1307
        %1373 = vst.msk [vmem:[%s245 + $0x28] sm:$0xff] %vm1367, %v1308
        %1374 = vst.msk [vmem:[%s245 + $0x30] sm:$0xff] %vm1367, %v1309
        %1375 = vst.msk [vmem:[%s245 + $0x38] sm:$0xff] %vm1367, %v1310
        %1376 = vst.msk [vmem:[%s245 + $0x40] sm:$0xff] %vm1367, %v1311
        %1377 = vst.msk [vmem:[%s245 + $0x48] sm:$0xff] %vm1367, %v1312
        %1378 = vst.msk [vmem:[%s245 + $0x50] sm:$0xff] %vm1367, %v1313
        %1379 = vst.msk [vmem:[%s245 + $0x58] sm:$0xff] %vm1367, %v1314
        %1380 = vst.msk [vmem:[%s245 + $0x60] sm:$0xff] %vm1367, %v1315
        %1381 = vst.msk [vmem:[%s245 + $0x68] sm:$0xff] %vm1367, %v1316
        %1382 = vst.msk [vmem:[%s245 + $0x70] sm:$0xff] %vm1367, %v1317
        %1383 = vst.msk [vmem:[%s245 + $0x78] sm:$0xff] %vm1367, %v1318
        %1384 = vst.msk [vmem:[%s245 + $0x80] sm:$0xff] %vm1367, %v1319
        %1385 = vst.msk [vmem:[%s245 + $0x88] sm:$0xff] %vm1367, %v1320
        %1386 = vst.msk [vmem:[%s245 + $0x90] sm:$0xff] %vm1367, %v1321
        %1387 = vst.msk [vmem:[%s245 + $0x98] sm:$0xff] %vm1367, %v1322
        %1388 = vst.msk [vmem:[%s245 + $0xa0] sm:$0xff] %vm1367, %v1323
        %1389 = vst.msk [vmem:[%s245 + $0xa8] sm:$0xff] %vm1367, %v1324
        %1390 = vst.msk [vmem:[%s245 + $0xb0] sm:$0xff] %vm1367, %v1325
        %1391 = vst.msk [vmem:[%s245 + $0xb8] sm:$0xff] %vm1367, %v1326
        %1392 = vst.msk [vmem:[%s245 + $0xc0] sm:$0xff] %vm1367, %v1327
        %1393 = vst.msk [vmem:[%s245 + $0xc8] sm:$0xff] %vm1367, %v1328
        %1394 = vst.msk [vmem:[%s245 + $0xd0] sm:$0xff] %vm1367, %v1329
        %1395 = vst.msk [vmem:[%s245 + $0xd8] sm:$0xff] %vm1367, %v1330
        %1396 = vst.msk [vmem:[%s245 + $0xe0] sm:$0xff] %vm1367, %v1331
        %1397 = vst.msk [vmem:[%s245 + $0xe8] sm:$0xff] %vm1367, %v1332
        %1398 = vst.msk [vmem:[%s245 + $0xf0] sm:$0xff] %vm1367, %v1333
        %1399 = vst.msk [vmem:[%s245 + $0xf8] sm:$0xff] %vm1367, %v1334
        %1400 = vst.msk [vmem:[%s245 + $0x100] sm:$0xff] %vm1367, %v1335
        %1401 = vst.msk [vmem:[%s245 + $0x108] sm:$0xff] %vm1367, %v1336
        %1402 = vst.msk [vmem:[%s245 + $0x110] sm:$0xff] %vm1367, %v1337
        %1403 = vst.msk [vmem:[%s245 + $0x118] sm:$0xff] %vm1367, %v1338
        %1404 = vst.msk [vmem:[%s245 + $0x120] sm:$0xff] %vm1367, %v1339
        %1405 = vst.msk [vmem:[%s245 + $0x128] sm:$0xff] %vm1367, %v1340
        %1406 = vst.msk [vmem:[%s245 + $0x130] sm:$0xff] %vm1367, %v1341
        %1407 = vst.msk [vmem:[%s245 + $0x138] sm:$0xff] %vm1367, %v1342
        %1408 = vst.msk [vmem:[%s245 + $0x140] sm:$0xff] %vm1367, %v1343
        %1409 = vst.msk [vmem:[%s245 + $0x148] sm:$0xff] %vm1367, %v1344
        %1410 = vst.msk [vmem:[%s245 + $0x150] sm:$0xff] %vm1367, %v1345
        %1411 = vst.msk [vmem:[%s245 + $0x158] sm:$0xff] %vm1367, %v1346
        %1412 = vst.msk [vmem:[%s245 + $0x160] sm:$0xff] %vm1367, %v1347
        %1413 = vst.msk [vmem:[%s245 + $0x168] sm:$0xff] %vm1367, %v1348
        %1414 = vst.msk [vmem:[%s245 + $0x170] sm:$0xff] %vm1367, %v1349
        %1415 = vst.msk [vmem:[%s245 + $0x178] sm:$0xff] %vm1367, %v1350
        %1416 = vst.msk [vmem:[%s245 + $0x180] sm:$0xff] %vm1367, %v1351
        %1417 = vst.msk [vmem:[%s245 + $0x188] sm:$0xff] %vm1367, %v1352
        %1418 = vst.msk [vmem:[%s245 + $0x190] sm:$0xff] %vm1367, %v1353
        %1419 = vst.msk [vmem:[%s245 + $0x198] sm:$0xff] %vm1367, %v1354
        %1420 = vst.msk [vmem:[%s245 + $0x1a0] sm:$0xff] %vm1367, %v1355
        %1421 = vst.msk [vmem:[%s245 + $0x1a8] sm:$0xff] %vm1367, %v1356
        %1422 = vst.msk [vmem:[%s245 + $0x1b0] sm:$0xff] %vm1367, %v1357
        %1423 = vst.msk [vmem:[%s245 + $0x1b8] sm:$0xff] %vm1367, %v1358
        %1424 = vst.msk [vmem:[%s245 + $0x1c0] sm:$0xff] %vm1367, %v1359
        %1425 = vst.msk [vmem:[%s245 + $0x1c8] sm:$0xff] %vm1367, %v1360
        %1426 = vst.msk [vmem:[%s245 + $0x1d0] sm:$0xff] %vm1367, %v1361
        %1427 = vst.msk [vmem:[%s245 + $0x1d8] sm:$0xff] %vm1367, %v1362
        %1428 = vst.msk [vmem:[%s245 + $0x1e0] sm:$0xff] %vm1367, %v1363
        %1429 = vst.msk [vmem:[%s245 + $0x1e8] sm:$0xff] %vm1367, %v1364
        %1430 = vst.msk [vmem:[%s245 + $0x1f0] sm:$0xff] %vm1367, %v1365
        %1431 = vst.msk [vmem:[%s245 + $0x1f8] sm:$0xff] %vm1367, %v1366
      $region48: #{tpu_custom_call.1} parent=35 // pred_fallthru
        _
      %s1432 = smul.u32 64, %s20
      %p1433 = scmp.lt.s32.totalorder %s1432, 127
      %s1434 = scalar_select %p1433, %s1432, 127
      %s1435 = smul.addr %s1434, 8
      %s1436 = scalar_lea.vmem %s4, %s1435
      // Predicated region
      $region49: #{tpu_custom_call.1} parent=35 // pred_check
        %p1437 = pneg %p142
      $region50: #{tpu_custom_call.1} parent=35 // pred_check_branch
        %1439 = sbr.rel (%p1437) target = $region52
      $region51: #{tpu_custom_call.1} parent=35 // pred_region
        %s1440 = smul.u32 64, %s20
      $region52: #{tpu_custom_call.1} parent=35 // pred_fallthru
        _
    $region36: #{tpu_custom_call.1} parent=5 // pred_fallthru
      _
    %p1441 = scmp.le.s32.totalorder 2, %s11
    // Predicated region
    $region53: #{tpu_custom_call.1} parent=5 // pred_check
      %p1442 = pneg %p1441
    $region54: #{tpu_custom_call.1} parent=5 // pred_check_branch
      %1444 = sbr.rel (%p1442) target = $region56
    $region55: #{tpu_custom_call.1} parent=5 // pred_region
      %s1445 = ssub.s32 %s11, 2
      // Predicated region
      $region57: #{tpu_custom_call.1} parent=55 // pred_check
        %p1446 = pneg %p148
      $region58: #{tpu_custom_call.1} parent=55 // pred_check_branch
        %1448 = sbr.rel (%p1446) target = $region60
      $region59: #{tpu_custom_call.1} parent=55 // pred_region
        %s1449 = smul.u32 64, %s22
        %p1450 = scmp.lt.s32.totalorder %s1449, 127
        %s1451 = scalar_select %p1450, %s1449, 127
        %s1452 = smul.addr %s1451, 8
        %s1453 = scalar_lea.vmem %s4, %s1452
      $region60: #{tpu_custom_call.1} parent=55 // pred_fallthru
        _
    $region56: #{tpu_custom_call.1} parent=5 // pred_fallthru
      _
  $region6: #{tpu_custom_call.1} parent=0 // loop_footer
    %s15 = sadd.s32 1, %s11
  $region7: #{tpu_custom_call.1} parent=0 // loop_footer_branch
    %10 = sbr.rel target = $region3
  $region8: #{tpu_custom_call.1} parent=0 // loop_exit
    _

</llo_original>
